<compile_context>
chip_gen: v5e
topology: v5e:2x2
jax: 0.10.0
libtpu: 0.0.40
codegen_flags: <defaults>
</compile_context>

<pallas_src>
import jax
import jax.numpy as jnp
from jax.experimental import pallas as pl
from jax.experimental.pallas import tpu as pltpu


def se_bottleneck_kernel(x_ref, w1_ref, b1_ref, w2_ref, b2_ref,
                         w3_ref, b3_ref, wse1_ref, wse2_ref,
                         o_ref, hpad_ref):
    _, H, W, Cin = x_ref.shape
    P = w1_ref.shape[1]
    C = w3_ref.shape[1]
    f32 = jnp.float32
    bf16 = jnp.bfloat16

    x = x_ref[0].reshape(H * W, Cin).astype(f32)            # residual (f32)

    # ---- conv1 (1x1) + bn1 (folded into w1/b1) + relu -------------------
    h1 = jnp.dot(x.astype(bf16), w1_ref[...], preferred_element_type=f32)
    h1 = jnp.maximum(h1 + b1_ref[...], 0.0)                 # [H*W, P] f32

    # ---- conv2 (3x3, stride 1, pad 1) + bn2 (folded) + relu -------------
    # Zero only the halo ring each step (cheap, and safe when the parallel
    # grid axis is split across cores); the interior is fully overwritten.
    zrow = jnp.zeros((1, W + 2, P), bf16)
    zcol = jnp.zeros((H + 2, 1, P), bf16)
    hpad_ref[0:1, :, :] = zrow
    hpad_ref[H + 1:H + 2, :, :] = zrow
    hpad_ref[:, 0:1, :] = zcol
    hpad_ref[:, W + 1:W + 2, :] = zcol
    hpad_ref[1:H + 1, 1:W + 1, :] = h1.astype(bf16).reshape(H, W, P)

    hp = hpad_ref[...]                                      # [H+2, W+2, P] bf16
    acc = jnp.zeros((H * W, P), f32)
    for kh in range(3):                                     # 3 matmuls, K = 3*P
        rows = hp[kh:kh + H]                                # [H, W+2, P]
        patch = jnp.concatenate(
            [rows[:, 0:W, :], rows[:, 1:W + 1, :], rows[:, 2:W + 2, :]],
            axis=-1).reshape(H * W, 3 * P)
        acc = acc + jnp.dot(patch, w2_ref[kh], preferred_element_type=f32)
    h2 = jnp.maximum(acc + b2_ref[...], 0.0)                # [H*W, P] f32

    # ---- conv3 (1x1) + bn3 (folded) --------------------------------------
    h3 = jnp.dot(h2.astype(bf16), w3_ref[...],
                 preferred_element_type=f32) + b3_ref[...]  # [H*W, C] f32

    # ---- SE gate: avg-pool (sum * 1/HW) -> fc1 -> relu -> fc2 -> sigmoid --
    pooled = jnp.sum(h3, axis=0, keepdims=True) * (1.0 / (H * W))   # [1, C]
    hid = jnp.maximum(
        jnp.dot(pooled, wse1_ref[...], preferred_element_type=f32), 0.0)
    gate = jax.nn.sigmoid(
        jnp.dot(hid, wse2_ref[...], preferred_element_type=f32))    # [1, C]

    # ---- scale + identity residual + final relu --------------------------
    out = jnp.maximum(h3 * gate + x, 0.0)
    o_ref[0] = out.reshape(H, W, C).astype(o_ref.dtype)


def se_bottleneck_nhwc(x, p):
    """x: [N, H, W, Cin] NHWC with Cin == 4*planes. p: prepare_params() output."""
    N, H, W, Cin = x.shape
    P = p["w1"].shape[1]
    C = p["w3"].shape[1]
    hid = p["wse1"].shape[1]
    assert Cin == C, ("identity residual requires inplanes == 4*planes "
                      "(stride=1, downsample=None)")

    weights = (p["w1"], p["b1"], p["w2"], p["b2"], p["w3"], p["b3"],
               p["wse1"], p["wse2"])
    itemsize = x.dtype.itemsize
    weight_bytes = sum(int(w.size) * w.dtype.itemsize for w in weights)
    tile_bytes = H * W * (Cin + C) * itemsize               # x tile + out tile
    scratch_bytes = (H + 2) * (W + 2) * P * 2               # bf16 pad scratch
    live_bytes = H * W * (6 * P + 2 * C) * 4                # h1/patch/h2/h3/out
    est = 2 * tile_bytes + weight_bytes + scratch_bytes + live_bytes + (4 << 20)
    vmem_limit = int(min(max(est, 32 << 20), 56 << 20))     # fits v5e/v6e/v7x

    flops = 2 * N * H * W * (Cin * P + 9 * P * P + P * C) + 4 * N * C * hid
    bytes_accessed = (int(x.size) + N * H * W * C) * itemsize + weight_bytes

    def full(shape):
        return pl.BlockSpec(shape, lambda n, s=shape: (0,) * len(s))

    return pl.pallas_call(
        se_bottleneck_kernel,
        out_shape=jax.ShapeDtypeStruct((N, H, W, C), x.dtype),
        grid=(N,),
        in_specs=[
            pl.BlockSpec((1, H, W, Cin), lambda n: (n, 0, 0, 0)),
            full((Cin, P)),            # w1 (bn1 folded, bf16)
            full((1, P)),              # b1
            full((3, 3 * P, P)),       # w2 (bn2 folded, bf16, [kh, kw*P+cin, cout])
            full((1, P)),              # b2
            full((P, C)),              # w3 (bn3 folded, bf16)
            full((1, C)),              # b3
            full((C, hid)),            # SE fc1
            full((hid, C)),            # SE fc2
        ],
        out_specs=pl.BlockSpec((1, H, W, C), lambda n: (n, 0, 0, 0)),
        scratch_shapes=[pltpu.VMEM((H + 2, W + 2, P), jnp.bfloat16)],
        compiler_params=pltpu.CompilerParams(
            dimension_semantics=("parallel",),
            vmem_limit_bytes=vmem_limit),
        cost_estimate=pl.CostEstimate(
            flops=flops, transcendentals=N * C, bytes_accessed=bytes_accessed),
    )(x, *weights)


def se_bottleneck(x_nchw, p):
    # TODO(synk): in a full network keep activations NHWC end-to-end; each of
    # these transposes is an extra HBM read+write of the activation.
    x = jnp.transpose(x_nchw, (0, 2, 3, 1))
    out = se_bottleneck_nhwc(x, p)
    return jnp.transpose(out, (0, 3, 1, 2))


def init_params(key, inplanes, planes, reduction=16):
    """Synthetic SEBottleneck parameters (f32, eval-mode BN folded to s/b)."""
    C = planes * 4
    hid = C // reduction
    ks = jax.random.split(key, 17)

    def nrm(k, shape, scale=0.1):
        return scale * jax.random.normal(k, shape, jnp.float32)

    def bn_fold(kg, kb, km, kv, n):
        gamma = jax.random.uniform(kg, (1, n), jnp.float32, 0.5, 1.5)
        beta = nrm(kb, (1, n))
        mean = nrm(km, (1, n))
        var = jax.random.uniform(kv, (1, n), jnp.float32, 0.5, 1.5)
        s = gamma / jnp.sqrt(var + 1e-5)
        return s, beta - mean * s

    s1, b1 = bn_fold(ks[0], ks[1], ks[2], ks[3], planes)
    s2, b2 = bn_fold(ks[4], ks[5], ks[6], ks[7], planes)
    s3, b3 = bn_fold(ks[8], ks[9], ks[10], ks[11], C)
    return {
        "w1": nrm(ks[12], (inplanes, planes)),      # conv1 [Cin, P]
        "s1": s1, "b1": b1,
        "w2": nrm(ks[13], (9, planes, planes)),     # conv2 [kh*3+kw, cin, cout]
        "s2": s2, "b2": b2,
        "w3": nrm(ks[14], (planes, C)),             # conv3 [P, C]
        "s3": s3, "b3": b3,
        "wse1": nrm(ks[15], (C, hid)),              # SE fc1 [C, C//r]
        "wse2": nrm(ks[16], (hid, C)),              # SE fc2 [C//r, C]
    }


def prepare_params(p):
    """Fold BN scales into the conv weights, lay out conv2 for K=3P matmuls,
    and cast matmul weights to bf16 (biases / SE weights stay f32)."""
    P = p["w1"].shape[1]
    w2 = p["w2"] * p["s2"][0][None, None, :]            # fold bn2 over cout
    w2 = w2.reshape(3, 3 * P, P)                        # [kh, kw*P+cin, cout]
    return {
        "w1": (p["w1"] * p["s1"]).astype(jnp.bfloat16), "b1": p["b1"],
        "w2": w2.astype(jnp.bfloat16),                  "b2": p["b2"],
        "w3": (p["w3"] * p["s3"]).astype(jnp.bfloat16), "b3": p["b3"],
        "wse1": p["wse1"], "wse2": p["wse2"],
    }


def reference_nhwc(x, p):
    """Pure-JAX/XLA reference using the same prepared (BN-folded, bf16) weights,
    so kernel/reference differences are only f32 accumulation order."""
    f32 = jnp.float32
    dn = ("NHWC", "HWIO", "NHWC")
    P = p["b1"].shape[1]
    h = jax.lax.conv_general_dilated(
        x.astype(jnp.bfloat16), p["w1"][None, None], (1, 1), "VALID",
        dimension_numbers=dn, preferred_element_type=f32)
    h = jnp.maximum(h + p["b1"], 0.0)
    w2 = p["w2"].reshape(3, 3, P, P)                    # HWIO
    h = jax.lax.conv_general_dilated(
        h.astype(jnp.bfloat16), w2, (1, 1), ((1, 1), (1, 1)),
        dimension_numbers=dn, preferred_element_type=f32)
    h = jnp.maximum(h + p["b2"], 0.0)
    h = jax.lax.conv_general_dilated(
        h.astype(jnp.bfloat16), p["w3"][None, None], (1, 1), "VALID",
        dimension_numbers=dn, preferred_element_type=f32)
    h = h + p["b3"]
    pooled = jnp.mean(h, axis=(1, 2))
    gate = jax.nn.sigmoid(jnp.maximum(pooled @ p["wse1"], 0.0) @ p["wse2"])
    return jnp.maximum(h * gate[:, None, None, :] + x.astype(f32), 0.0)


if __name__ == "__main__":
    # planes=32 -> block output channels 4*planes = 128 (lane aligned);
    # inplanes = 128 so the identity residual (stride=1, no downsample) holds.
    N, planes, H, W = 2, 32, 8, 8
    inplanes = planes * 4
    reduction = 16

    key = jax.random.PRNGKey(0)
    kx, kp = jax.random.split(key)
    x_nchw = jax.random.normal(kx, (N, inplanes, H, W), jnp.float32)
    params = prepare_params(init_params(kp, inplanes, planes, reduction))

    out = jax.block_until_ready(se_bottleneck(x_nchw, params))

    x_nhwc = jnp.transpose(x_nchw, (0, 2, 3, 1))
    ref = jnp.transpose(reference_nhwc(x_nhwc, params), (0, 3, 1, 2))
    ref = jax.block_until_ready(ref)

    assert out.shape == (N, planes * 4, H, W)
    max_err = float(jnp.max(jnp.abs(out - ref)))
    assert jnp.allclose(out, ref, atol=5e-3, rtol=5e-3), f"mismatch: {max_err}"
    print("KERNEL_OK")
</pallas_src>

<mosaic_0001>
module attributes {stable_mosaic.version = 11 : i64} {
  func.func @se_bottleneck_kernel(%arg0: i32, %arg1: memref<1x8x8x128xf32, #tpu.memory_space<vmem>>, %arg2: memref<128x32xbf16, #tpu.memory_space<vmem>>, %arg3: memref<1x32xf32, #tpu.memory_space<vmem>>, %arg4: memref<3x96x32xbf16, #tpu.memory_space<vmem>>, %arg5: memref<1x32xf32, #tpu.memory_space<vmem>>, %arg6: memref<32x128xbf16, #tpu.memory_space<vmem>>, %arg7: memref<1x128xf32, #tpu.memory_space<vmem>>, %arg8: memref<128x8xf32, #tpu.memory_space<vmem>>, %arg9: memref<8x128xf32, #tpu.memory_space<vmem>>, %arg10: memref<1x8x8x128xf32, #tpu.memory_space<vmem>>, %arg11: memref<10x10x32xbf16, #tpu.memory_space<vmem>>) attributes {dimension_semantics = [#tpu.dimension_semantics<parallel>], iteration_bounds = array<i64: 2>, scalar_prefetch = 0 : i64, scratch_operands = 1 : i64, tpu.core_type = #tpu.core_type<tc>, window_params = [{transform_indices = @transform_0, window_bounds = array<i64: 1, 8, 8, 128>}, {pipeline_mode = #tpu.pipeline_mode<synchronous>, transform_indices = @transform_1, window_bounds = array<i64: 128, 32>}, {pipeline_mode = #tpu.pipeline_mode<synchronous>, transform_indices = @transform_2, window_bounds = array<i64: 1, 32>}, {pipeline_mode = #tpu.pipeline_mode<synchronous>, transform_indices = @transform_3, window_bounds = array<i64: 3, 96, 32>}, {pipeline_mode = #tpu.pipeline_mode<synchronous>, transform_indices = @transform_4, window_bounds = array<i64: 1, 32>}, {pipeline_mode = #tpu.pipeline_mode<synchronous>, transform_indices = @transform_5, window_bounds = array<i64: 32, 128>}, {pipeline_mode = #tpu.pipeline_mode<synchronous>, transform_indices = @transform_6, window_bounds = array<i64: 1, 128>}, {pipeline_mode = #tpu.pipeline_mode<synchronous>, transform_indices = @transform_7, window_bounds = array<i64: 128, 8>}, {pipeline_mode = #tpu.pipeline_mode<synchronous>, transform_indices = @transform_8, window_bounds = array<i64: 8, 128>}, {transform_indices = @transform_9, window_bounds = array<i64: 1, 8, 8, 128>}]} {
    %c0 = arith.constant 0 : index
    %c0_0 = arith.constant 0 : index
    %c0_1 = arith.constant 0 : index
    %c0_2 = arith.constant 0 : index
    %0 = vector.load %arg1[%c0, %c0_0, %c0_1, %c0_2] : memref<1x8x8x128xf32, #tpu.memory_space<vmem>>, vector<1x8x8x128xf32>
    %1 = vector.shape_cast %0 : vector<1x8x8x128xf32> to vector<8x8x128xf32>
    %2 = vector.shape_cast %1 : vector<8x8x128xf32> to vector<64x128xf32>
    %3 = arith.truncf %2 : vector<64x128xf32> to vector<64x128xbf16>
    %c0_3 = arith.constant 0 : index
    %c0_4 = arith.constant 0 : index
    %4 = vector.load %arg2[%c0_3, %c0_4] : memref<128x32xbf16, #tpu.memory_space<vmem>>, vector<128x32xbf16>
    %cst = arith.constant dense<0.000000e+00> : vector<64x32xf32>
    %5 = tpu.matmul %3, %4, %cst {dimension_numbers = #tpu.dot_dimension_numbers<[1], [0], [0], [1], [0, 0, 1, 1], [], []>} : vector<64x128xbf16>, vector<128x32xbf16>, vector<64x32xf32> -> vector<64x32xf32>
    %c0_5 = arith.constant 0 : index
    %c0_6 = arith.constant 0 : index
    %6 = vector.load %arg3[%c0_5, %c0_6] : memref<1x32xf32, #tpu.memory_space<vmem>>, vector<1x32xf32>
    %7 = vector.broadcast %6 : vector<1x32xf32> to vector<64x32xf32>
    %8 = arith.addf %5, %7 : vector<64x32xf32>
    %cst_7 = arith.constant 0.000000e+00 : f32
    %9 = vector.broadcast %cst_7 : f32 to vector<64x32xf32>
    %10 = arith.maximumf %8, %9 : vector<64x32xf32>
    %cst_8 = arith.constant 0.000000e+00 : bf16
    %11 = vector.broadcast %cst_8 : bf16 to vector<1x10x32xbf16>
    %cst_9 = arith.constant 0.000000e+00 : bf16
    %12 = vector.broadcast %cst_9 : bf16 to vector<10x1x32xbf16>
    %c0_10 = arith.constant 0 : index
    %c0_11 = arith.constant 0 : index
    %c0_12 = arith.constant 0 : index
    %13 = vector.load %arg11[%c0_10, %c0_11, %c0_12] : memref<10x10x32xbf16, #tpu.memory_space<vmem>>, vector<1x10x32xbf16>
    tpu.vector_store %arg11[%c0_10, %c0_11, %c0_12], %11 {strides = array<i32>} : memref<10x10x32xbf16, #tpu.memory_space<vmem>>, vector<1x10x32xbf16>,
    %c9 = arith.constant 9 : index
    %c0_13 = arith.constant 0 : index
    %c0_14 = arith.constant 0 : index
    %14 = vector.load %arg11[%c9, %c0_13, %c0_14] : memref<10x10x32xbf16, #tpu.memory_space<vmem>>, vector<1x10x32xbf16>
    tpu.vector_store %arg11[%c9, %c0_13, %c0_14], %11 {strides = array<i32>} : memref<10x10x32xbf16, #tpu.memory_space<vmem>>, vector<1x10x32xbf16>,
    %c0_15 = arith.constant 0 : index
    %c0_16 = arith.constant 0 : index
    %c0_17 = arith.constant 0 : index
    %15 = vector.load %arg11[%c0_15, %c0_16, %c0_17] : memref<10x10x32xbf16, #tpu.memory_space<vmem>>, vector<10x1x32xbf16>
    tpu.vector_store %arg11[%c0_15, %c0_16, %c0_17], %12 {strides = array<i32>} : memref<10x10x32xbf16, #tpu.memory_space<vmem>>, vector<10x1x32xbf16>,
    %c0_18 = arith.constant 0 : index
    %c9_19 = arith.constant 9 : index
    %c0_20 = arith.constant 0 : index
    %16 = vector.load %arg11[%c0_18, %c9_19, %c0_20] : memref<10x10x32xbf16, #tpu.memory_space<vmem>>, vector<10x1x32xbf16>
    tpu.vector_store %arg11[%c0_18, %c9_19, %c0_20], %12 {strides = array<i32>} : memref<10x10x32xbf16, #tpu.memory_space<vmem>>, vector<10x1x32xbf16>,
    %17 = arith.truncf %10 : vector<64x32xf32> to vector<64x32xbf16>
    %18 = vector.shape_cast %17 : vector<64x32xbf16> to vector<8x8x32xbf16>
    %c1 = arith.constant 1 : index
    %c1_21 = arith.constant 1 : index
    %c0_22 = arith.constant 0 : index
    %19 = vector.load %arg11[%c1, %c1_21, %c0_22] : memref<10x10x32xbf16, #tpu.memory_space<vmem>>, vector<8x8x32xbf16>
    tpu.vector_store %arg11[%c1, %c1_21, %c0_22], %18 {strides = array<i32>} : memref<10x10x32xbf16, #tpu.memory_space<vmem>>, vector<8x8x32xbf16>,
    %c0_23 = arith.constant 0 : index
    %c0_24 = arith.constant 0 : index
    %c0_25 = arith.constant 0 : index
    %20 = vector.load %arg11[%c0_23, %c0_24, %c0_25] : memref<10x10x32xbf16, #tpu.memory_space<vmem>>, vector<10x10x32xbf16>
    %cst_26 = arith.constant 0.000000e+00 : f32
    %21 = vector.broadcast %cst_26 : f32 to vector<64x32xf32>
    %22 = vector.extract_strided_slice %20 {offsets = [0, 0, 0], sizes = [8, 10, 32], strides = [1, 1, 1]} : vector<10x10x32xbf16> to vector<8x10x32xbf16>
    %23 = vector.extract_strided_slice %22 {offsets = [0, 0, 0], sizes = [8, 8, 32], strides = [1, 1, 1]} : vector<8x10x32xbf16> to vector<8x8x32xbf16>
    %24 = vector.extract_strided_slice %22 {offsets = [0, 1, 0], sizes = [8, 8, 32], strides = [1, 1, 1]} : vector<8x10x32xbf16> to vector<8x8x32xbf16>
    %25 = vector.extract_strided_slice %22 {offsets = [0, 2, 0], sizes = [8, 8, 32], strides = [1, 1, 1]} : vector<8x10x32xbf16> to vector<8x8x32xbf16>
    %26 = tpu.concatenate %23, %24, %25 in 2 : vector<8x8x32xbf16>, vector<8x8x32xbf16>, vector<8x8x32xbf16> -> vector<8x8x96xbf16>
    %27 = vector.shape_cast %26 : vector<8x8x96xbf16> to vector<64x96xbf16>
    %c0_27 = arith.constant 0 : index
    %c0_28 = arith.constant 0 : index
    %c0_29 = arith.constant 0 : index
    %28 = vector.load %arg4[%c0_27, %c0_28, %c0_29] : memref<3x96x32xbf16, #tpu.memory_space<vmem>>, vector<1x96x32xbf16>
    %29 = vector.shape_cast %28 : vector<1x96x32xbf16> to vector<96x32xbf16>
    %cst_30 = arith.constant dense<0.000000e+00> : vector<64x32xf32>
    %30 = tpu.matmul %27, %29, %cst_30 {dimension_numbers = #tpu.dot_dimension_numbers<[1], [0], [0], [1], [0, 0, 1, 1], [], []>} : vector<64x96xbf16>, vector<96x32xbf16>, vector<64x32xf32> -> vector<64x32xf32>
    %31 = arith.addf %21, %30 : vector<64x32xf32>
    %32 = vector.extract_strided_slice %20 {offsets = [1, 0, 0], sizes = [8, 10, 32], strides = [1, 1, 1]} : vector<10x10x32xbf16> to vector<8x10x32xbf16>
    %33 = vector.extract_strided_slice %32 {offsets = [0, 0, 0], sizes = [8, 8, 32], strides = [1, 1, 1]} : vector<8x10x32xbf16> to vector<8x8x32xbf16>
    %34 = vector.extract_strided_slice %32 {offsets = [0, 1, 0], sizes = [8, 8, 32], strides = [1, 1, 1]} : vector<8x10x32xbf16> to vector<8x8x32xbf16>
    %35 = vector.extract_strided_slice %32 {offsets = [0, 2, 0], sizes = [8, 8, 32], strides = [1, 1, 1]} : vector<8x10x32xbf16> to vector<8x8x32xbf16>
    %36 = tpu.concatenate %33, %34, %35 in 2 : vector<8x8x32xbf16>, vector<8x8x32xbf16>, vector<8x8x32xbf16> -> vector<8x8x96xbf16>
    %37 = vector.shape_cast %36 : vector<8x8x96xbf16> to vector<64x96xbf16>
    %c1_31 = arith.constant 1 : index
    %c0_32 = arith.constant 0 : index
    %c0_33 = arith.constant 0 : index
    %38 = vector.load %arg4[%c1_31, %c0_32, %c0_33] : memref<3x96x32xbf16, #tpu.memory_space<vmem>>, vector<1x96x32xbf16>
    %39 = vector.shape_cast %38 : vector<1x96x32xbf16> to vector<96x32xbf16>
    %cst_34 = arith.constant dense<0.000000e+00> : vector<64x32xf32>
    %40 = tpu.matmul %37, %39, %cst_34 {dimension_numbers = #tpu.dot_dimension_numbers<[1], [0], [0], [1], [0, 0, 1, 1], [], []>} : vector<64x96xbf16>, vector<96x32xbf16>, vector<64x32xf32> -> vector<64x32xf32>
    %41 = arith.addf %31, %40 : vector<64x32xf32>
    %42 = vector.extract_strided_slice %20 {offsets = [2, 0, 0], sizes = [8, 10, 32], strides = [1, 1, 1]} : vector<10x10x32xbf16> to vector<8x10x32xbf16>
    %43 = vector.extract_strided_slice %42 {offsets = [0, 0, 0], sizes = [8, 8, 32], strides = [1, 1, 1]} : vector<8x10x32xbf16> to vector<8x8x32xbf16>
    %44 = vector.extract_strided_slice %42 {offsets = [0, 1, 0], sizes = [8, 8, 32], strides = [1, 1, 1]} : vector<8x10x32xbf16> to vector<8x8x32xbf16>
    %45 = vector.extract_strided_slice %42 {offsets = [0, 2, 0], sizes = [8, 8, 32], strides = [1, 1, 1]} : vector<8x10x32xbf16> to vector<8x8x32xbf16>
    %46 = tpu.concatenate %43, %44, %45 in 2 : vector<8x8x32xbf16>, vector<8x8x32xbf16>, vector<8x8x32xbf16> -> vector<8x8x96xbf16>
    %47 = vector.shape_cast %46 : vector<8x8x96xbf16> to vector<64x96xbf16>
    %c2 = arith.constant 2 : index
    %c0_35 = arith.constant 0 : index
    %c0_36 = arith.constant 0 : index
    %48 = vector.load %arg4[%c2, %c0_35, %c0_36] : memref<3x96x32xbf16, #tpu.memory_space<vmem>>, vector<1x96x32xbf16>
    %49 = vector.shape_cast %48 : vector<1x96x32xbf16> to vector<96x32xbf16>
    %cst_37 = arith.constant dense<0.000000e+00> : vector<64x32xf32>
    %50 = tpu.matmul %47, %49, %cst_37 {dimension_numbers = #tpu.dot_dimension_numbers<[1], [0], [0], [1], [0, 0, 1, 1], [], []>} : vector<64x96xbf16>, vector<96x32xbf16>, vector<64x32xf32> -> vector<64x32xf32>
    %51 = arith.addf %41, %50 : vector<64x32xf32>
    %c0_38 = arith.constant 0 : index
    %c0_39 = arith.constant 0 : index
    %52 = vector.load %arg5[%c0_38, %c0_39] : memref<1x32xf32, #tpu.memory_space<vmem>>, vector<1x32xf32>
    %53 = vector.broadcast %52 : vector<1x32xf32> to vector<64x32xf32>
    %54 = arith.addf %51, %53 : vector<64x32xf32>
    %cst_40 = arith.constant 0.000000e+00 : f32
    %55 = vector.broadcast %cst_40 : f32 to vector<64x32xf32>
    %56 = arith.maximumf %54, %55 : vector<64x32xf32>
    %57 = arith.truncf %56 : vector<64x32xf32> to vector<64x32xbf16>
    %c0_41 = arith.constant 0 : index
    %c0_42 = arith.constant 0 : index
    %58 = vector.load %arg6[%c0_41, %c0_42] : memref<32x128xbf16, #tpu.memory_space<vmem>>, vector<32x128xbf16>
    %cst_43 = arith.constant dense<0.000000e+00> : vector<64x128xf32>
    %59 = tpu.matmul %57, %58, %cst_43 {dimension_numbers = #tpu.dot_dimension_numbers<[1], [0], [0], [1], [0, 0, 1, 1], [], []>} : vector<64x32xbf16>, vector<32x128xbf16>, vector<64x128xf32> -> vector<64x128xf32>
    %c0_44 = arith.constant 0 : index
    %c0_45 = arith.constant 0 : index
    %60 = vector.load %arg7[%c0_44, %c0_45] : memref<1x128xf32, #tpu.memory_space<vmem>>, vector<1x128xf32>
    %61 = vector.broadcast %60 : vector<1x128xf32> to vector<64x128xf32>
    %62 = arith.addf %59, %61 : vector<64x128xf32>
    %cst_46 = arith.constant dense<0.000000e+00> : vector<128xf32>
    %63 = vector.multi_reduction <add>, %62, %cst_46 [0] : vector<64x128xf32> to vector<128xf32>
    %64 = vector.shape_cast %63 : vector<128xf32> to vector<1x128xf32>
    %cst_47 = arith.constant 1.562500e-02 : f32
    %65 = vector.broadcast %cst_47 : f32 to vector<1x128xf32>
    %66 = arith.mulf %64, %65 : vector<1x128xf32>
    %c0_48 = arith.constant 0 : index
    %c0_49 = arith.constant 0 : index
    %67 = vector.load %arg8[%c0_48, %c0_49] : memref<128x8xf32, #tpu.memory_space<vmem>>, vector<128x8xf32>
    %cst_50 = arith.constant dense<0.000000e+00> : vector<1x8xf32>
    %68 = tpu.matmul %66, %67, %cst_50 {dimension_numbers = #tpu.dot_dimension_numbers<[1], [0], [0], [1], [0, 0, 1, 1], [], []>} : vector<1x128xf32>, vector<128x8xf32>, vector<1x8xf32> -> vector<1x8xf32>
    %cst_51 = arith.constant 0.000000e+00 : f32
    %69 = vector.broadcast %cst_51 : f32 to vector<1x8xf32>
    %70 = arith.maximumf %68, %69 : vector<1x8xf32>
    %c0_52 = arith.constant 0 : index
    %c0_53 = arith.constant 0 : index
    %71 = vector.load %arg9[%c0_52, %c0_53] : memref<8x128xf32, #tpu.memory_space<vmem>>, vector<8x128xf32>
    %cst_54 = arith.constant dense<0.000000e+00> : vector<1x128xf32>
    %72 = tpu.matmul %70, %71, %cst_54 {dimension_numbers = #tpu.dot_dimension_numbers<[1], [0], [0], [1], [0, 0, 1, 1], [], []>} : vector<1x8xf32>, vector<8x128xf32>, vector<1x128xf32> -> vector<1x128xf32>
    %73 = arith.negf %72 : vector<1x128xf32>
    %74 = math.exp %73 : vector<1x128xf32>
    %cst_55 = arith.constant 1.000000e+00 : f32
    %75 = vector.broadcast %cst_55 : f32 to vector<1x128xf32>
    %76 = arith.addf %75, %74 : vector<1x128xf32>
    %77 = arith.divf %75, %76 : vector<1x128xf32>
    %78 = vector.broadcast %77 : vector<1x128xf32> to vector<64x128xf32>
    %79 = arith.mulf %62, %78 : vector<64x128xf32>
    %80 = arith.addf %79, %2 : vector<64x128xf32>
    %cst_56 = arith.constant 0.000000e+00 : f32
    %81 = vector.broadcast %cst_56 : f32 to vector<64x128xf32>
    %82 = arith.maximumf %80, %81 : vector<64x128xf32>
    %83 = vector.shape_cast %82 : vector<64x128xf32> to vector<8x8x128xf32>
    %c0_57 = arith.constant 0 : index
    %c0_58 = arith.constant 0 : index
    %c0_59 = arith.constant 0 : index
    %c0_60 = arith.constant 0 : index
    %84 = vector.load %arg10[%c0_57, %c0_58, %c0_59, %c0_60] : memref<1x8x8x128xf32, #tpu.memory_space<vmem>>, vector<1x8x8x128xf32>
    %85 = vector.shape_cast %84 : vector<1x8x8x128xf32> to vector<8x8x128xf32>
    %86 = vector.shape_cast %83 : vector<8x8x128xf32> to vector<1x8x8x128xf32>
    tpu.vector_store %arg10[%c0_57, %c0_58, %c0_59, %c0_60], %86 {strides = array<i32>} : memref<1x8x8x128xf32, #tpu.memory_space<vmem>>, vector<1x8x8x128xf32>,
    return
  }
  func.func @transform_0(%arg0: i32) -> (i32, i32, i32, i32) {
    %c0_i32 = arith.constant 0 : i32
    %c0_i32_0 = arith.constant 0 : i32
    %c0_i32_1 = arith.constant 0 : i32
    %c0_i32_2 = arith.constant 0 : i32
    return %arg0, %c0_i32, %c0_i32_0, %c0_i32_1 : i32, i32, i32, i32
  }
  func.func @transform_1(%arg0: i32) -> (i32, i32) {
    %c0_i32 = arith.constant 0 : i32
    %c0_i32_0 = arith.constant 0 : i32
    %c0_i32_1 = arith.constant 0 : i32
    return %c0_i32, %c0_i32_0 : i32, i32
  }
  func.func @transform_2(%arg0: i32) -> (i32, i32) {
    %c0_i32 = arith.constant 0 : i32
    %c0_i32_0 = arith.constant 0 : i32
    %c0_i32_1 = arith.constant 0 : i32
    return %c0_i32, %c0_i32_0 : i32, i32
  }
  func.func @transform_3(%arg0: i32) -> (i32, i32, i32) {
    %c0_i32 = arith.constant 0 : i32
    %c0_i32_0 = arith.constant 0 : i32
    %c0_i32_1 = arith.constant 0 : i32
    %c0_i32_2 = arith.constant 0 : i32
    return %c0_i32, %c0_i32_0, %c0_i32_1 : i32, i32, i32
  }
  func.func @transform_4(%arg0: i32) -> (i32, i32) {
    %c0_i32 = arith.constant 0 : i32
    %c0_i32_0 = arith.constant 0 : i32
    %c0_i32_1 = arith.constant 0 : i32
    return %c0_i32, %c0_i32_0 : i32, i32
  }
  func.func @transform_5(%arg0: i32) -> (i32, i32) {
    %c0_i32 = arith.constant 0 : i32
    %c0_i32_0 = arith.constant 0 : i32
    %c0_i32_1 = arith.constant 0 : i32
    return %c0_i32, %c0_i32_0 : i32, i32
  }
  func.func @transform_6(%arg0: i32) -> (i32, i32) {
    %c0_i32 = arith.constant 0 : i32
    %c0_i32_0 = arith.constant 0 : i32
    %c0_i32_1 = arith.constant 0 : i32
    return %c0_i32, %c0_i32_0 : i32, i32
  }
  func.func @transform_7(%arg0: i32) -> (i32, i32) {
    %c0_i32 = arith.constant 0 : i32
    %c0_i32_0 = arith.constant 0 : i32
    %c0_i32_1 = arith.constant 0 : i32
    return %c0_i32, %c0_i32_0 : i32, i32
  }
  func.func @transform_8(%arg0: i32) -> (i32, i32) {
    %c0_i32 = arith.constant 0 : i32
    %c0_i32_0 = arith.constant 0 : i32
    %c0_i32_1 = arith.constant 0 : i32
    return %c0_i32, %c0_i32_0 : i32, i32
  }
  func.func @transform_9(%arg0: i32) -> (i32, i32, i32, i32) {
    %c0_i32 = arith.constant 0 : i32
    %c0_i32_0 = arith.constant 0 : i32
    %c0_i32_1 = arith.constant 0 : i32
    %c0_i32_2 = arith.constant 0 : i32
    return %arg0, %c0_i32, %c0_i32_0, %c0_i32_1 : i32, i32, i32, i32
  }
}

</mosaic_0001>

<llo_original>
// kernel: tpu_custom_call.1
$region0: #{tpu_custom_call.1}
  #allocation0 [shape = 'u32[]', space=smem, size = 0x4, offset = 0x4, fixed_abs, tag = 'smem constant byte address 0x4 - core index']
  #allocation1 [shape = 'u32[72,128]{1,0:T(1,128)}', space=vmem, size = 0x9000, scoped, tag = 'internal scratch']
  #allocation2 [shape = 'bf16[10,10,32]{2,1,0:T(8,128)(2,1)}', space=vmem, size = 0xa000, scoped, tag = 'scratch operand']
  %s0 = inlined_call_operand.vmem [shape: f32[2,8,8,128], index: 0, kind: input, shape index: {}]
  %s1 = inlined_call_operand.vmem [shape: bf16[128,32], index: 1, kind: input, shape index: {}]
  %s2 = inlined_call_operand.vmem [shape: f32[1,32], index: 2, kind: input, shape index: {}]
  %s3 = inlined_call_operand.vmem [shape: bf16[3,96,32], index: 3, kind: input, shape index: {}]
  %s4 = inlined_call_operand.vmem [shape: f32[1,32], index: 4, kind: input, shape index: {}]
  %s5 = inlined_call_operand.vmem [shape: bf16[32,128], index: 5, kind: input, shape index: {}]
  %s6 = inlined_call_operand.vmem [shape: f32[1,128], index: 6, kind: input, shape index: {}]
  %s7 = inlined_call_operand.vmem [shape: f32[128,8], index: 7, kind: input, shape index: {}]
  %s8 = inlined_call_operand.vmem [shape: f32[8,128], index: 8, kind: input, shape index: {}]
  %s9 = inlined_call_operand.hbm [shape: f32[2,8,8,128], index: 9, kind: output, shape index: {}]
  %s10 = sld [smem:[#allocation0]]
  $region69: #{tpu_custom_call.1} parent=0
    _
  %s12 = ssub.s32 1, %s10
  %s13 = scalar_select 0, %s12, %s10
  $region1: #{tpu_custom_call.1} parent=0
    #allocation3 [shape = 'u8[65536]{0}', space=vmem, size = 0x10000, scoped, tag = 'output window, operand 0']
    #allocation4 [shape = 's32[2]{0}', space=sflag, size = 0x8, scoped, tag = 'scoped memory for tpu_custom_call.1']
    %14 = vsyncpa [#allocation4], 0
    %s15 = scalar_lea.sflag [#allocation4], 1
    %16 = vsyncpa %s15, 0
    loop: start=0, step=1, limit=4
    $region2: #{tpu_custom_call.1} parent=1 // loop_pre_header
      _
    $region3: #{tpu_custom_call.1} parent=1 // loop_header
      %s18 = sphi 0, %s22
      %p19 = scmp.ge.s32.totalorder %s18, 4
      %s28 = sphi 0, %s30
      %s31 = sphi 0, %s28
      %s32 = sphi 0, %s31
      %s48 = sphi 0, %s32
      %s52 = sphi 0, %s52
      %s54 = sphi 0, %s52
      %s55 = sphi 0, %s54
      %s69 = sphi 0, %s55
      %s73 = sphi 0, %s73
      %s75 = sphi 0, %s73
      %s76 = sphi 0, %s75
      %s90 = sphi 0, %s76
      %s94 = sphi 0, %s94
      %s96 = sphi 0, %s94
      %s97 = sphi 0, %s96
      %s111 = sphi 0, %s97
      %s115 = sphi 0, %s115
      %s117 = sphi 0, %s115
      %s118 = sphi 0, %s117
      %s132 = sphi 0, %s118
      %s136 = sphi 0, %s136
      %s138 = sphi 0, %s136
      %s139 = sphi 0, %s138
      %s153 = sphi 0, %s139
      %s157 = sphi 0, %s157
      %s159 = sphi 0, %s157
      %s160 = sphi 0, %s159
      %s174 = sphi 0, %s160
      %s178 = sphi 0, %s178
      %s180 = sphi 0, %s178
      %s181 = sphi 0, %s180
      %s195 = sphi 0, %s181
      %s199 = sphi 0, %s199
      %s201 = sphi 0, %s199
      %s202 = sphi 0, %s201
      %s216 = sphi 0, %s202
      %s222 = sphi 0, %s224
      %s225 = sphi 0, %s222
      %s226 = sphi 0, %s225
      %s242 = sphi 0, %s226
    $region4: #{tpu_custom_call.1} parent=1 // loop_header_branch
      %21 = sbr.rel (%p19) target = $region8
    $region5: #{tpu_custom_call.1} parent=1 // loop_body
      %s23 = ssub.s32 %s18, 1
      %s24 = ssub.s32 %s18, 2
      %s25 = sadd.s32 %s18, 1
      %s26 = ssub.s32 %s18, %s25
      %p27 = scmp.eq.s32.totalorder %s26, 0
      %s29 = sadd.s32 %s28, 1
      %s30 = scalar_select %p27, %s28, %s29
      %p33 = pneg %p27
      %p34 = scmp.eq.s32.totalorder %s18, 1
      %p35 = por %p33, %p34
      %p36 = scmp.ne.s32.totalorder %s28, %s31
      %p37 = scmp.eq.s32.totalorder %s18, 0
      %p38 = por %p36, %p37
      %p39 = scmp.ne.s32.totalorder %s28, %s31
      %p40 = scmp.eq.s32.totalorder %s23, 1
      %p41 = por %p39, %p40
      %p42 = scmp.ne.s32.totalorder %s31, %s32
      %p43 = scmp.eq.s32.totalorder %s23, 0
      %p44 = por %p42, %p43
      %p45 = scmp.ne.s32.totalorder %s31, %s32
      %p46 = scmp.eq.s32.totalorder %s24, 1
      %p47 = por %p45, %p46
      %p49 = scmp.ne.s32.totalorder %s32, %s48
      %p50 = scmp.eq.s32.totalorder %s24, 0
      %p51 = por %p49, %p50
      %s53 = sadd.s32 %s52, 1
      %p56 = scmp.eq.s32.totalorder %s18, 1
      %p57 = scmp.ne.s32.totalorder %s52, %s54
      %p58 = scmp.eq.s32.totalorder %s18, 0
      %p59 = por %p57, %p58
      %p60 = scmp.ne.s32.totalorder %s52, %s54
      %p61 = scmp.eq.s32.totalorder %s23, 1
      %p62 = por %p60, %p61
      %p63 = scmp.ne.s32.totalorder %s54, %s55
      %p64 = scmp.eq.s32.totalorder %s23, 0
      %p65 = por %p63, %p64
      %p66 = scmp.ne.s32.totalorder %s54, %s55
      %p67 = scmp.eq.s32.totalorder %s24, 1
      %p68 = por %p66, %p67
      %p70 = scmp.ne.s32.totalorder %s55, %s69
      %p71 = scmp.eq.s32.totalorder %s24, 0
      %p72 = por %p70, %p71
      %s74 = sadd.s32 %s73, 1
      %p77 = scmp.eq.s32.totalorder %s18, 1
      %p78 = scmp.ne.s32.totalorder %s73, %s75
      %p79 = scmp.eq.s32.totalorder %s18, 0
      %p80 = por %p78, %p79
      %p81 = scmp.ne.s32.totalorder %s73, %s75
      %p82 = scmp.eq.s32.totalorder %s23, 1
      %p83 = por %p81, %p82
      %p84 = scmp.ne.s32.totalorder %s75, %s76
      %p85 = scmp.eq.s32.totalorder %s23, 0
      %p86 = por %p84, %p85
      %p87 = scmp.ne.s32.totalorder %s75, %s76
      %p88 = scmp.eq.s32.totalorder %s24, 1
      %p89 = por %p87, %p88
      %p91 = scmp.ne.s32.totalorder %s76, %s90
      %p92 = scmp.eq.s32.totalorder %s24, 0
      %p93 = por %p91, %p92
      %s95 = sadd.s32 %s94, 1
      %p98 = scmp.eq.s32.totalorder %s18, 1
      %p99 = scmp.ne.s32.totalorder %s94, %s96
      %p100 = scmp.eq.s32.totalorder %s18, 0
      %p101 = por %p99, %p100
      %p102 = scmp.ne.s32.totalorder %s94, %s96
      %p103 = scmp.eq.s32.totalorder %s23, 1
      %p104 = por %p102, %p103
      %p105 = scmp.ne.s32.totalorder %s96, %s97
      %p106 = scmp.eq.s32.totalorder %s23, 0
      %p107 = por %p105, %p106
      %p108 = scmp.ne.s32.totalorder %s96, %s97
      %p109 = scmp.eq.s32.totalorder %s24, 1
      %p110 = por %p108, %p109
      %p112 = scmp.ne.s32.totalorder %s97, %s111
      %p113 = scmp.eq.s32.totalorder %s24, 0
      %p114 = por %p112, %p113
      %s116 = sadd.s32 %s115, 1
      %p119 = scmp.eq.s32.totalorder %s18, 1
      %p120 = scmp.ne.s32.totalorder %s115, %s117
      %p121 = scmp.eq.s32.totalorder %s18, 0
      %p122 = por %p120, %p121
      %p123 = scmp.ne.s32.totalorder %s115, %s117
      %p124 = scmp.eq.s32.totalorder %s23, 1
      %p125 = por %p123, %p124
      %p126 = scmp.ne.s32.totalorder %s117, %s118
      %p127 = scmp.eq.s32.totalorder %s23, 0
      %p128 = por %p126, %p127
      %p129 = scmp.ne.s32.totalorder %s117, %s118
      %p130 = scmp.eq.s32.totalorder %s24, 1
      %p131 = por %p129, %p130
      %p133 = scmp.ne.s32.totalorder %s118, %s132
      %p134 = scmp.eq.s32.totalorder %s24, 0
      %p135 = por %p133, %p134
      %s137 = sadd.s32 %s136, 1
      %p140 = scmp.eq.s32.totalorder %s18, 1
      %p141 = scmp.ne.s32.totalorder %s136, %s138
      %p142 = scmp.eq.s32.totalorder %s18, 0
      %p143 = por %p141, %p142
      %p144 = scmp.ne.s32.totalorder %s136, %s138
      %p145 = scmp.eq.s32.totalorder %s23, 1
      %p146 = por %p144, %p145
      %p147 = scmp.ne.s32.totalorder %s138, %s139
      %p148 = scmp.eq.s32.totalorder %s23, 0
      %p149 = por %p147, %p148
      %p150 = scmp.ne.s32.totalorder %s138, %s139
      %p151 = scmp.eq.s32.totalorder %s24, 1
      %p152 = por %p150, %p151
      %p154 = scmp.ne.s32.totalorder %s139, %s153
      %p155 = scmp.eq.s32.totalorder %s24, 0
      %p156 = por %p154, %p155
      %s158 = sadd.s32 %s157, 1
      %p161 = scmp.eq.s32.totalorder %s18, 1
      %p162 = scmp.ne.s32.totalorder %s157, %s159
      %p163 = scmp.eq.s32.totalorder %s18, 0
      %p164 = por %p162, %p163
      %p165 = scmp.ne.s32.totalorder %s157, %s159
      %p166 = scmp.eq.s32.totalorder %s23, 1
      %p167 = por %p165, %p166
      %p168 = scmp.ne.s32.totalorder %s159, %s160
      %p169 = scmp.eq.s32.totalorder %s23, 0
      %p170 = por %p168, %p169
      %p171 = scmp.ne.s32.totalorder %s159, %s160
      %p172 = scmp.eq.s32.totalorder %s24, 1
      %p173 = por %p171, %p172
      %p175 = scmp.ne.s32.totalorder %s160, %s174
      %p176 = scmp.eq.s32.totalorder %s24, 0
      %p177 = por %p175, %p176
      %s179 = sadd.s32 %s178, 1
      %p182 = scmp.eq.s32.totalorder %s18, 1
      %p183 = scmp.ne.s32.totalorder %s178, %s180
      %p184 = scmp.eq.s32.totalorder %s18, 0
      %p185 = por %p183, %p184
      %p186 = scmp.ne.s32.totalorder %s178, %s180
      %p187 = scmp.eq.s32.totalorder %s23, 1
      %p188 = por %p186, %p187
      %p189 = scmp.ne.s32.totalorder %s180, %s181
      %p190 = scmp.eq.s32.totalorder %s23, 0
      %p191 = por %p189, %p190
      %p192 = scmp.ne.s32.totalorder %s180, %s181
      %p193 = scmp.eq.s32.totalorder %s24, 1
      %p194 = por %p192, %p193
      %p196 = scmp.ne.s32.totalorder %s181, %s195
      %p197 = scmp.eq.s32.totalorder %s24, 0
      %p198 = por %p196, %p197
      %s200 = sadd.s32 %s199, 1
      %p203 = scmp.eq.s32.totalorder %s18, 1
      %p204 = scmp.ne.s32.totalorder %s199, %s201
      %p205 = scmp.eq.s32.totalorder %s18, 0
      %p206 = por %p204, %p205
      %p207 = scmp.ne.s32.totalorder %s199, %s201
      %p208 = scmp.eq.s32.totalorder %s23, 1
      %p209 = por %p207, %p208
      %p210 = scmp.ne.s32.totalorder %s201, %s202
      %p211 = scmp.eq.s32.totalorder %s23, 0
      %p212 = por %p210, %p211
      %p213 = scmp.ne.s32.totalorder %s201, %s202
      %p214 = scmp.eq.s32.totalorder %s24, 1
      %p215 = por %p213, %p214
      %p217 = scmp.ne.s32.totalorder %s202, %s216
      %p218 = scmp.eq.s32.totalorder %s24, 0
      %p219 = por %p217, %p218
      %s220 = ssub.s32 %s18, %s25
      %p221 = scmp.eq.s32.totalorder %s220, 0
      %s223 = sadd.s32 %s222, 1
      %s224 = scalar_select %p221, %s222, %s223
      %p227 = pneg %p221
      %p228 = scmp.eq.s32.totalorder %s18, 1
      %p229 = por %p227, %p228
      %p230 = scmp.ne.s32.totalorder %s222, %s225
      %p231 = scmp.eq.s32.totalorder %s18, 0
      %p232 = por %p230, %p231
      %p233 = scmp.ne.s32.totalorder %s222, %s225
      %p234 = scmp.eq.s32.totalorder %s23, 1
      %p235 = por %p233, %p234
      %p236 = scmp.ne.s32.totalorder %s225, %s226
      %p237 = scmp.eq.s32.totalorder %s23, 0
      %p238 = por %p236, %p237
      %p239 = scmp.ne.s32.totalorder %s225, %s226
      %p240 = scmp.eq.s32.totalorder %s24, 1
      %p241 = por %p239, %p240
      %p243 = scmp.ne.s32.totalorder %s226, %s242
      %p244 = scmp.eq.s32.totalorder %s24, 0
      %p245 = por %p243, %p244
      %p246 = scmp.le.s32.totalorder 1, %s18
      %p247 = scmp.lt.s32.totalorder %s18, 3
      %p248 = pnand %p246, %p247
      %p249 = pneg %p248
      // Predicated region
      $region9: #{tpu_custom_call.1} parent=5 // pred_check
        _
      $region10: #{tpu_custom_call.1} parent=5 // pred_check_branch
        %251 = sbr.rel (%p248) target = $region12
      $region11: #{tpu_custom_call.1} parent=5 // pred_region
        %s252 = ssub.s32 %s18, 1
        // Predicated region
        $region13: #{tpu_custom_call.1} parent=11 // pred_check
          %p253 = pneg %p65
        $region14: #{tpu_custom_call.1} parent=11 // pred_check_branch
          %255 = sbr.rel (%p253) target = $region16
        $region15: #{tpu_custom_call.1} parent=11 // pred_region
          _
        $region16: #{tpu_custom_call.1} parent=11 // pred_fallthru
          _
        // Predicated region
        $region17: #{tpu_custom_call.1} parent=11 // pred_check
          %p256 = pneg %p86
        $region18: #{tpu_custom_call.1} parent=11 // pred_check_branch
          %258 = sbr.rel (%p256) target = $region20
        $region19: #{tpu_custom_call.1} parent=11 // pred_region
          _
        $region20: #{tpu_custom_call.1} parent=11 // pred_fallthru
          _
        // Predicated region
        $region21: #{tpu_custom_call.1} parent=11 // pred_check
          %p259 = pneg %p107
        $region22: #{tpu_custom_call.1} parent=11 // pred_check_branch
          %261 = sbr.rel (%p259) target = $region24
        $region23: #{tpu_custom_call.1} parent=11 // pred_region
          _
        $region24: #{tpu_custom_call.1} parent=11 // pred_fallthru
          _
        // Predicated region
        $region25: #{tpu_custom_call.1} parent=11 // pred_check
          %p262 = pneg %p128
        $region26: #{tpu_custom_call.1} parent=11 // pred_check_branch
          %264 = sbr.rel (%p262) target = $region28
        $region27: #{tpu_custom_call.1} parent=11 // pred_region
          _
        $region28: #{tpu_custom_call.1} parent=11 // pred_fallthru
          _
        // Predicated region
        $region29: #{tpu_custom_call.1} parent=11 // pred_check
          %p265 = pneg %p149
        $region30: #{tpu_custom_call.1} parent=11 // pred_check_branch
          %267 = sbr.rel (%p265) target = $region32
        $region31: #{tpu_custom_call.1} parent=11 // pred_region
          _
        $region32: #{tpu_custom_call.1} parent=11 // pred_fallthru
          _
        // Predicated region
        $region33: #{tpu_custom_call.1} parent=11 // pred_check
          %p268 = pneg %p170
        $region34: #{tpu_custom_call.1} parent=11 // pred_check_branch
          %270 = sbr.rel (%p268) target = $region36
        $region35: #{tpu_custom_call.1} parent=11 // pred_region
          _
        $region36: #{tpu_custom_call.1} parent=11 // pred_fallthru
          _
        // Predicated region
        $region37: #{tpu_custom_call.1} parent=11 // pred_check
          %p271 = pneg %p191
        $region38: #{tpu_custom_call.1} parent=11 // pred_check_branch
          %273 = sbr.rel (%p271) target = $region40
        $region39: #{tpu_custom_call.1} parent=11 // pred_region
          _
        $region40: #{tpu_custom_call.1} parent=11 // pred_fallthru
          _
        // Predicated region
        $region41: #{tpu_custom_call.1} parent=11 // pred_check
          %p274 = pneg %p212
        $region42: #{tpu_custom_call.1} parent=11 // pred_check_branch
          %276 = sbr.rel (%p274) target = $region44
        $region43: #{tpu_custom_call.1} parent=11 // pred_region
          _
        $region44: #{tpu_custom_call.1} parent=11 // pred_fallthru
          _
      $region12: #{tpu_custom_call.1} parent=5 // pred_fallthru
        _
      %p277 = scmp.lt.s32.totalorder %s18, 2
      // Predicated region
      $region45: #{tpu_custom_call.1} parent=5 // pred_check
        %p278 = pneg %p277
      $region46: #{tpu_custom_call.1} parent=5 // pred_check_branch
        %280 = sbr.rel (%p278) target = $region48
      $region47: #{tpu_custom_call.1} parent=5 // pred_region
        // Predicated region
        $region49: #{tpu_custom_call.1} parent=47 // pred_check
          %p281 = pneg %p38
        $region50: #{tpu_custom_call.1} parent=47 // pred_check_branch
          %283 = sbr.rel (%p281) target = $region52
        $region51: #{tpu_custom_call.1} parent=47 // pred_region
          %p284 = scmp.lt.s32.totalorder %s18, 1
          %s285 = scalar_select %p284, %s18, 1
          %s286 = smul.addr %s285, 8
          %s287 = smul.addr %s286, 8
          %s288 = scalar_lea.vmem %s0, %s287
        $region52: #{tpu_custom_call.1} parent=47 // pred_fallthru
          _
      $region48: #{tpu_custom_call.1} parent=5 // pred_fallthru
        _
      %p289 = scmp.le.s32.totalorder 1, %s18
      %p290 = scmp.lt.s32.totalorder %s18, 3
      %p291 = pnand %p289, %p290
      %p292 = pneg %p291
      // Predicated region
      $region53: #{tpu_custom_call.1} parent=5 // pred_check
        _
      $region54: #{tpu_custom_call.1} parent=5 // pred_check_branch
        %294 = sbr.rel (%p291) target = $region56
      $region55: #{tpu_custom_call.1} parent=5 // pred_region
        %s295 = ssub.s32 %s18, 1
        %p296 = scmp.lt.s32.totalorder %s23, 1
        %s297 = scalar_select %p296, %s23, 1
        %s298 = smul.addr %s297, 8
        %s299 = smul.addr %s298, 8
        %s300 = scalar_lea.vmem %s0, %s299
        %p301 = pneg %p44
        %p302 = pneg %p41
        %p303 = pneg %p65
        %p304 = pneg %p62
        %p305 = pneg %p86
        %p306 = pneg %p83
        %p307 = pneg %p107
        %p308 = pneg %p104
        %p309 = pneg %p128
        %p310 = pneg %p125
        %p311 = pneg %p149
        %p312 = pneg %p146
        %p313 = pneg %p170
        %p314 = pneg %p167
        %p315 = pneg %p191
        %p316 = pneg %p188
        %p317 = pneg %p212
        %p318 = pneg %p209
        %p319 = pneg %p238
        %p320 = pneg %p235
        %s321 = sand.u32 %s225, 1
        %s322 = scalar_lea.sflag [#allocation4], %s321
        %s323 = sand.u32 %s225, 1
        %s324 = smul.addr %s323, 64
        %s325 = scalar_lea.vmem [#allocation3], %s324
        %p326 = scmp.lt.s32.totalorder %s23, 1
        %s327 = scalar_select %p326, %s23, 1
        %s328 = smul.addr %s327, 8
        %s329 = smul.addr %s328, 8
        %s330 = scalar_lea.vmem %s0, %s329
        %v332 = vld [vmem:[%s330] sm:$0xff]
        %v333 = vld [vmem:[%s330 + $0x8] sm:$0xff]
        %v334 = vld [vmem:[%s330 + $0x10] sm:$0xff]
        %v335 = vld [vmem:[%s330 + $0x18] sm:$0xff]
        %v336 = vld [vmem:[%s330 + $0x20] sm:$0xff]
        %v337 = vld [vmem:[%s330 + $0x28] sm:$0xff]
        %v338 = vld [vmem:[%s330 + $0x30] sm:$0xff]
        %v339 = vld [vmem:[%s330 + $0x38] sm:$0xff]
        %v340 = vpack.c.bf16 %v333, %v332
        %v341 = vpack.c.bf16 %v335, %v334
        %v342 = vpack.c.bf16 %v337, %v336
        %v343 = vpack.c.bf16 %v339, %v338
        %v344 = vld [vmem:[%s1] sm:$0xf]
        %v345 = vld [vmem:[%s1 + $0x4] sm:$0xf]
        %v346 = vld [vmem:[%s1 + $0x8] sm:$0xf]
        %v347 = vld [vmem:[%s1 + $0xc] sm:$0xf]
        %v348 = vld [vmem:[%s1 + $0x10] sm:$0xf]
        %v349 = vld [vmem:[%s1 + $0x14] sm:$0xf]
        %v350 = vld [vmem:[%s1 + $0x18] sm:$0xf]
        %v351 = vld [vmem:[%s1 + $0x1c] sm:$0xf]
        %v352 = vld [vmem:[%s1 + $0x20] sm:$0xf]
        %v353 = vld [vmem:[%s1 + $0x24] sm:$0xf]
        %v354 = vld [vmem:[%s1 + $0x28] sm:$0xf]
        %v355 = vld [vmem:[%s1 + $0x2c] sm:$0xf]
        %v356 = vld [vmem:[%s1 + $0x30] sm:$0xf]
        %v357 = vld [vmem:[%s1 + $0x34] sm:$0xf]
        %v358 = vld [vmem:[%s1 + $0x38] sm:$0xf]
        %v359 = vld [vmem:[%s1 + $0x3c] sm:$0xf]
        %v360 = vld [vmem:[%s2] sm:$0x1]
        %v362 = vperm.slane %v360, 0
        %v380 = vunpack.c.l.b16 %v344
        %v381 = vunpack.c.l.b16 %v345
        %v382 = vunpack.c.l.b16 %v346
        %v383 = vunpack.c.l.b16 %v347
        %v384 = vunpack.c.l.b16 %v348
        %v385 = vunpack.c.l.b16 %v349
        %v386 = vunpack.c.l.b16 %v350
        %v387 = vunpack.c.l.b16 %v351
        %v388 = vunpack.c.l.b16 %v352
        %v389 = vunpack.c.l.b16 %v353
        %v390 = vunpack.c.l.b16 %v354
        %v391 = vunpack.c.l.b16 %v355
        %v392 = vunpack.c.l.b16 %v356
        %v393 = vunpack.c.l.b16 %v357
        %v394 = vunpack.c.l.b16 %v358
        %v395 = vunpack.c.l.b16 %v359
        %v396 = vpack.c.b16 %v381, %v380
        %v397 = vpack.c.b16 %v383, %v382
        %v398 = vpack.c.b16 %v385, %v384
        %v399 = vpack.c.b16 %v387, %v386
        %v400 = vpack.c.b16 %v389, %v388
        %v401 = vpack.c.b16 %v391, %v390
        %v402 = vpack.c.b16 %v393, %v392
        %v403 = vpack.c.b16 %v395, %v394
        %412 = vmatpush.bf16.msra.mxu0 %v403
        %413 = vmatpush.bf16.msra.mxu0 %v402
        %414 = vmatpush.bf16.msra.mxu0 %v401
        %415 = vmatpush.bf16.msra.mxu0 %v400
        %416 = vmatpush.bf16.msra.mxu0 %v399
        %417 = vmatpush.bf16.msra.mxu0 %v398
        %418 = vmatpush.bf16.msra.mxu0 %v397
        %419 = vmatpush.bf16.msra.mxu0 %v396
        %420 = vmatmul.bf16.gmra.mxu0 %v340
        %v421 = vpop.f32.mrf.mxu0
        %v422 = vadd.f32 %v362, %v421
        %v423 = vpop.f32.mrf.mxu0
        %v424 = vadd.f32 %v362, %v423
        %425 = vmatmul.bf16.gmra.mxu0 %v341
        %v426 = vpop.f32.mrf.mxu0
        %v427 = vadd.f32 %v362, %v426
        %v428 = vpop.f32.mrf.mxu0
        %v429 = vadd.f32 %v362, %v428
        %430 = vmatmul.bf16.gmra.mxu0 %v342
        %v431 = vpop.f32.mrf.mxu0
        %v432 = vadd.f32 %v362, %v431
        %v433 = vpop.f32.mrf.mxu0
        %v434 = vadd.f32 %v362, %v433
        %435 = vmatmul.bf16.gmra.mxu0 %v343
        %v436 = vpop.f32.mrf.mxu0
        %v437 = vadd.f32 %v362, %v436
        %v438 = vpop.f32.mrf.mxu0
        %v439 = vadd.f32 %v362, %v438
        %440 = vdwg.mxu0
        %v441 = vmax.f32 %v422, 0.0
        %v442 = vmax.f32 %v424, 0.0
        %v443 = vmax.f32 %v427, 0.0
        %v444 = vmax.f32 %v429, 0.0
        %v445 = vmax.f32 %v432, 0.0
        %v446 = vmax.f32 %v434, 0.0
        %v447 = vmax.f32 %v437, 0.0
        %v448 = vmax.f32 %v439, 0.0
        %vm449 = vcmask 257024
        %450 = vst.msk [vmem:[#allocation2] sm:$0xf] %vm449, 0
        %vm451 = vcmask 253952
        %452 = vst.msk [vmem:[#allocation2 + $0x4] sm:$0x1] %vm451, 0
        %s453 = scalar_lea.vmem [#allocation2], 72
        %454 = vst.msk [vmem:[%s453] sm:$0xf] %vm449, 0
        %455 = vst.msk [vmem:[%s453 + $0x4] sm:$0x1] %vm451, 0
        %vm456 = vcmask 253952
        %vm457 = vsmask.f32 256
        %vm458 = vmand %vm456, %vm457
        %v459 = vld [vmem:[#allocation2] sm:$0x1]
        %v460 = vsel %vm458, 0, %v459
        %461 = vst [vmem:[#allocation2] sm:$0x1] %v460
        %v462 = vld [vmem:[#allocation2 + $0x8] sm:$0x1]
        %v463 = vsel %vm458, 0, %v462
        %464 = vst [vmem:[#allocation2 + $0x8] sm:$0x1] %v463
        %v465 = vld [vmem:[#allocation2 + $0x10] sm:$0x1]
        %v466 = vsel %vm458, 0, %v465
        %467 = vst [vmem:[#allocation2 + $0x10] sm:$0x1] %v466
        %v468 = vld [vmem:[#allocation2 + $0x18] sm:$0x1]
        %v469 = vsel %vm458, 0, %v468
        %470 = vst [vmem:[#allocation2 + $0x18] sm:$0x1] %v469
        %v471 = vld [vmem:[#allocation2 + $0x20] sm:$0x1]
        %v472 = vsel %vm458, 0, %v471
        %473 = vst [vmem:[#allocation2 + $0x20] sm:$0x1] %v472
        %v474 = vld [vmem:[#allocation2 + $0x28] sm:$0x1]
        %v475 = vsel %vm458, 0, %v474
        %476 = vst [vmem:[#allocation2 + $0x28] sm:$0x1] %v475
        %v477 = vld [vmem:[#allocation2 + $0x30] sm:$0x1]
        %v478 = vsel %vm458, 0, %v477
        %479 = vst [vmem:[#allocation2 + $0x30] sm:$0x1] %v478
        %v480 = vld [vmem:[#allocation2 + $0x38] sm:$0x1]
        %v481 = vsel %vm458, 0, %v480
        %482 = vst [vmem:[#allocation2 + $0x38] sm:$0x1] %v481
        %v483 = vld [vmem:[#allocation2 + $0x40] sm:$0x1]
        %v484 = vsel %vm458, 0, %v483
        %485 = vst [vmem:[#allocation2 + $0x40] sm:$0x1] %v484
        %v486 = vld [vmem:[#allocation2 + $0x48] sm:$0x1]
        %v487 = vsel %vm458, 0, %v486
        %488 = vst [vmem:[#allocation2 + $0x48] sm:$0x1] %v487
        %vm489 = vsmask.f32 7938
        %vm490 = vmand %vm456, %vm489
        %v491 = vld [vmem:[#allocation2 + $0x4] sm:$0x1]
        %v492 = vsel %vm490, 0, %v491
        %493 = vst [vmem:[#allocation2 + $0x4] sm:$0x1] %v492
        %v494 = vld [vmem:[#allocation2 + $0xc] sm:$0x1]
        %v495 = vsel %vm490, 0, %v494
        %496 = vst [vmem:[#allocation2 + $0xc] sm:$0x1] %v495
        %v497 = vld [vmem:[#allocation2 + $0x14] sm:$0x1]
        %v498 = vsel %vm490, 0, %v497
        %499 = vst [vmem:[#allocation2 + $0x14] sm:$0x1] %v498
        %v500 = vld [vmem:[#allocation2 + $0x1c] sm:$0x1]
        %v501 = vsel %vm490, 0, %v500
        %502 = vst [vmem:[#allocation2 + $0x1c] sm:$0x1] %v501
        %v503 = vld [vmem:[#allocation2 + $0x24] sm:$0x1]
        %v504 = vsel %vm490, 0, %v503
        %505 = vst [vmem:[#allocation2 + $0x24] sm:$0x1] %v504
        %v506 = vld [vmem:[#allocation2 + $0x2c] sm:$0x1]
        %v507 = vsel %vm490, 0, %v506
        %508 = vst [vmem:[#allocation2 + $0x2c] sm:$0x1] %v507
        %v509 = vld [vmem:[#allocation2 + $0x34] sm:$0x1]
        %v510 = vsel %vm490, 0, %v509
        %511 = vst [vmem:[#allocation2 + $0x34] sm:$0x1] %v510
        %v512 = vld [vmem:[#allocation2 + $0x3c] sm:$0x1]
        %v513 = vsel %vm490, 0, %v512
        %514 = vst [vmem:[#allocation2 + $0x3c] sm:$0x1] %v513
        %v515 = vld [vmem:[#allocation2 + $0x44] sm:$0x1]
        %v516 = vsel %vm490, 0, %v515
        %517 = vst [vmem:[#allocation2 + $0x44] sm:$0x1] %v516
        %v518 = vld [vmem:[#allocation2 + $0x4c] sm:$0x1]
        %v519 = vsel %vm490, 0, %v518
        %520 = vst [vmem:[#allocation2 + $0x4c] sm:$0x1] %v519
        %v521 = vpack.c.bf16 %v441, %v441
        %v522 = vpack.c.bf16 %v442, %v442
        %v523 = vpack.c.bf16 %v443, %v443
        %v524 = vpack.c.bf16 %v444, %v444
        %v525 = vpack.c.bf16 %v445, %v445
        %v526 = vpack.c.bf16 %v446, %v446
        %v527 = vpack.c.bf16 %v447, %v447
        %v528 = vpack.c.bf16 %v448, %v448
        %v530 = vshrl.u32 %v521, 16
        %v532 = vrot.slane %v530, 7
        %v533 = vshll.u32 %v521, 16
        %v535 = vor.u32 %v532, %v533
        %v536 = vrot.slane %v532, 4
        %v538 = vshrl.u32 %v522, 16
        %v540 = vrot.slane %v538, 7
        %v541 = vshll.u32 %v522, 16
        %v543 = vor.u32 %v540, %v541
        %v544 = vrot.slane %v540, 4
        %v546 = vshrl.u32 %v523, 16
        %v548 = vrot.slane %v546, 7
        %v549 = vshll.u32 %v523, 16
        %v551 = vor.u32 %v548, %v549
        %v552 = vrot.slane %v548, 4
        %v554 = vshrl.u32 %v524, 16
        %v556 = vrot.slane %v554, 7
        %v557 = vshll.u32 %v524, 16
        %v559 = vor.u32 %v556, %v557
        %v560 = vrot.slane %v556, 4
        %v562 = vshrl.u32 %v525, 16
        %v564 = vrot.slane %v562, 7
        %v565 = vshll.u32 %v525, 16
        %v567 = vor.u32 %v564, %v565
        %v568 = vrot.slane %v564, 4
        %v570 = vshrl.u32 %v526, 16
        %v572 = vrot.slane %v570, 7
        %v573 = vshll.u32 %v526, 16
        %v575 = vor.u32 %v572, %v573
        %v576 = vrot.slane %v572, 4
        %v578 = vshrl.u32 %v527, 16
        %v580 = vrot.slane %v578, 7
        %v581 = vshll.u32 %v527, 16
        %v583 = vor.u32 %v580, %v581
        %v584 = vrot.slane %v580, 4
        %v586 = vshrl.u32 %v528, 16
        %v588 = vrot.slane %v586, 7
        %v589 = vshll.u32 %v528, 16
        %v591 = vor.u32 %v588, %v589
        %v592 = vrot.slane %v588, 4
        %s609 = scalar_lea.vmem [#allocation2], 8
        %vm610 = vcmask 257024
        %vm611 = vmand %vm610, %vm489
        %v612 = vld [vmem:[%s609] sm:$0xf]
        %v613 = vsel %vm611, %v535, %v612
        %614 = vst [vmem:[%s609] sm:$0xf] %v613
        %v615 = vld [vmem:[%s609 + $0x4] sm:$0x1]
        %v616 = vsel %vm458, %v536, %v615
        %617 = vst [vmem:[%s609 + $0x4] sm:$0x1] %v616
        %v618 = vld [vmem:[%s609 + $0x8] sm:$0xf]
        %v619 = vsel %vm611, %v543, %v618
        %620 = vst [vmem:[%s609 + $0x8] sm:$0xf] %v619
        %v621 = vld [vmem:[%s609 + $0xc] sm:$0x1]
        %v622 = vsel %vm458, %v544, %v621
        %623 = vst [vmem:[%s609 + $0xc] sm:$0x1] %v622
        %v624 = vld [vmem:[%s609 + $0x10] sm:$0xf]
        %v625 = vsel %vm611, %v551, %v624
        %626 = vst [vmem:[%s609 + $0x10] sm:$0xf] %v625
        %v627 = vld [vmem:[%s609 + $0x14] sm:$0x1]
        %v628 = vsel %vm458, %v552, %v627
        %629 = vst [vmem:[%s609 + $0x14] sm:$0x1] %v628
        %v630 = vld [vmem:[%s609 + $0x18] sm:$0xf]
        %v631 = vsel %vm611, %v559, %v630
        %632 = vst [vmem:[%s609 + $0x18] sm:$0xf] %v631
        %v633 = vld [vmem:[%s609 + $0x1c] sm:$0x1]
        %v634 = vsel %vm458, %v560, %v633
        %635 = vst [vmem:[%s609 + $0x1c] sm:$0x1] %v634
        %v636 = vld [vmem:[%s609 + $0x20] sm:$0xf]
        %v637 = vsel %vm611, %v567, %v636
        %638 = vst [vmem:[%s609 + $0x20] sm:$0xf] %v637
        %v639 = vld [vmem:[%s609 + $0x24] sm:$0x1]
        %v640 = vsel %vm458, %v568, %v639
        %641 = vst [vmem:[%s609 + $0x24] sm:$0x1] %v640
        %v642 = vld [vmem:[%s609 + $0x28] sm:$0xf]
        %v643 = vsel %vm611, %v575, %v642
        %644 = vst [vmem:[%s609 + $0x28] sm:$0xf] %v643
        %v645 = vld [vmem:[%s609 + $0x2c] sm:$0x1]
        %v646 = vsel %vm458, %v576, %v645
        %647 = vst [vmem:[%s609 + $0x2c] sm:$0x1] %v646
        %v648 = vld [vmem:[%s609 + $0x30] sm:$0xf]
        %v649 = vsel %vm611, %v583, %v648
        %650 = vst [vmem:[%s609 + $0x30] sm:$0xf] %v649
        %v651 = vld [vmem:[%s609 + $0x34] sm:$0x1]
        %v652 = vsel %vm458, %v584, %v651
        %653 = vst [vmem:[%s609 + $0x34] sm:$0x1] %v652
        %v654 = vld [vmem:[%s609 + $0x38] sm:$0xf]
        %v655 = vsel %vm611, %v591, %v654
        %656 = vst [vmem:[%s609 + $0x38] sm:$0xf] %v655
        %v657 = vld [vmem:[%s609 + $0x3c] sm:$0x1]
        %v658 = vsel %vm458, %v592, %v657
        %659 = vst [vmem:[%s609 + $0x3c] sm:$0x1] %v658
        %v660 = vld [vmem:[#allocation2] sm:$0xf]
        %v661 = vld [vmem:[#allocation2 + $0x4] sm:$0x1]
        %v662 = vld [vmem:[#allocation2 + $0x8] sm:$0xf]
        %v663 = vld [vmem:[#allocation2 + $0xc] sm:$0x1]
        %v664 = vld [vmem:[#allocation2 + $0x10] sm:$0xf]
        %v665 = vld [vmem:[#allocation2 + $0x14] sm:$0x1]
        %v666 = vld [vmem:[#allocation2 + $0x18] sm:$0xf]
        %v667 = vld [vmem:[#allocation2 + $0x1c] sm:$0x1]
        %v668 = vld [vmem:[#allocation2 + $0x20] sm:$0xf]
        %v669 = vld [vmem:[#allocation2 + $0x24] sm:$0x1]
        %v670 = vld [vmem:[#allocation2 + $0x28] sm:$0xf]
        %v671 = vld [vmem:[#allocation2 + $0x2c] sm:$0x1]
        %v672 = vld [vmem:[#allocation2 + $0x30] sm:$0xf]
        %v673 = vld [vmem:[#allocation2 + $0x34] sm:$0x1]
        %v674 = vld [vmem:[#allocation2 + $0x38] sm:$0xf]
        %v675 = vld [vmem:[#allocation2 + $0x3c] sm:$0x1]
        %v676 = vld [vmem:[#allocation2 + $0x40] sm:$0xf]
        %v677 = vld [vmem:[#allocation2 + $0x44] sm:$0x1]
        %v678 = vld [vmem:[#allocation2 + $0x48] sm:$0xf]
        %v679 = vld [vmem:[#allocation2 + $0x4c] sm:$0x1]
        %v696 = vunpack.c.l.b16 %v660
        %v697 = vunpack.c.l.b16 %v661
        %v698 = vunpack.c.l.b16 %v662
        %v699 = vunpack.c.l.b16 %v663
        %v700 = vunpack.c.l.b16 %v664
        %v701 = vunpack.c.l.b16 %v665
        %v702 = vunpack.c.l.b16 %v666
        %v703 = vunpack.c.l.b16 %v667
        %v704 = vunpack.c.l.b16 %v668
        %v705 = vunpack.c.l.b16 %v669
        %v706 = vunpack.c.l.b16 %v670
        %v707 = vunpack.c.l.b16 %v671
        %v708 = vunpack.c.l.b16 %v672
        %v709 = vunpack.c.l.b16 %v673
        %v710 = vunpack.c.l.b16 %v674
        %v711 = vunpack.c.l.b16 %v675
        %v712 = vpack.c.b16 %v697, %v696
        %v713 = vpack.c.b16 %v699, %v698
        %v714 = vpack.c.b16 %v701, %v700
        %v715 = vpack.c.b16 %v703, %v702
        %v716 = vpack.c.b16 %v705, %v704
        %v717 = vpack.c.b16 %v707, %v706
        %v718 = vpack.c.b16 %v709, %v708
        %v719 = vpack.c.b16 %v711, %v710
        %v721 = vshrl.u32 %v712, 16
        %v723 = vshll.u32 %v712, 16
        %v725 = vrot.slane %v723, 1
        %v726 = vor.u32 %v721, %v725
        %v728 = vshrl.u32 %v713, 16
        %v730 = vshll.u32 %v713, 16
        %v732 = vrot.slane %v730, 1
        %v733 = vor.u32 %v728, %v732
        %v735 = vshrl.u32 %v714, 16
        %v737 = vshll.u32 %v714, 16
        %v739 = vrot.slane %v737, 1
        %v740 = vor.u32 %v735, %v739
        %v742 = vshrl.u32 %v715, 16
        %v744 = vshll.u32 %v715, 16
        %v746 = vrot.slane %v744, 1
        %v747 = vor.u32 %v742, %v746
        %v749 = vshrl.u32 %v716, 16
        %v751 = vshll.u32 %v716, 16
        %v753 = vrot.slane %v751, 1
        %v754 = vor.u32 %v749, %v753
        %v756 = vshrl.u32 %v717, 16
        %v758 = vshll.u32 %v717, 16
        %v760 = vrot.slane %v758, 1
        %v761 = vor.u32 %v756, %v760
        %v763 = vshrl.u32 %v718, 16
        %v765 = vshll.u32 %v718, 16
        %v767 = vrot.slane %v765, 1
        %v768 = vor.u32 %v763, %v767
        %v770 = vshrl.u32 %v719, 16
        %v772 = vshll.u32 %v719, 16
        %v774 = vrot.slane %v772, 1
        %v775 = vor.u32 %v770, %v774
        %776 = vrot.lane.b32.xlu0 %v726, 32
        %v777 = vpop.permute.xlu0 %776
        %778 = vrot.lane.b32.xlu0 %v733, 32
        %v779 = vpop.permute.xlu0 %778
        %780 = vrot.lane.b32.xlu0 %v740, 32
        %v781 = vpop.permute.xlu0 %780
        %782 = vrot.lane.b32.xlu0 %v747, 32
        %v783 = vpop.permute.xlu0 %782
        %784 = vrot.lane.b32.xlu0 %v754, 32
        %v785 = vpop.permute.xlu0 %784
        %786 = vrot.lane.b32.xlu0 %v761, 32
        %v787 = vpop.permute.xlu0 %786
        %788 = vrot.lane.b32.xlu0 %v768, 32
        %v789 = vpop.permute.xlu0 %788
        %790 = vrot.lane.b32.xlu0 %v775, 32
        %v791 = vpop.permute.xlu0 %790
        %v792 = vrot.slane %v712, 1
        %v793 = vrot.slane %v713, 1
        %v794 = vrot.slane %v714, 1
        %v795 = vrot.slane %v715, 1
        %v796 = vrot.slane %v716, 1
        %v797 = vrot.slane %v717, 1
        %v798 = vrot.slane %v718, 1
        %v799 = vrot.slane %v719, 1
        %800 = vrot.lane.b32.xlu0 %v792, 64
        %v801 = vpop.permute.xlu0 %800
        %802 = vrot.lane.b32.xlu0 %v793, 64
        %v803 = vpop.permute.xlu0 %802
        %804 = vrot.lane.b32.xlu0 %v794, 64
        %v805 = vpop.permute.xlu0 %804
        %806 = vrot.lane.b32.xlu0 %v795, 64
        %v807 = vpop.permute.xlu0 %806
        %808 = vrot.lane.b32.xlu0 %v796, 64
        %v809 = vpop.permute.xlu0 %808
        %810 = vrot.lane.b32.xlu0 %v797, 64
        %v811 = vpop.permute.xlu0 %810
        %812 = vrot.lane.b32.xlu0 %v798, 64
        %v813 = vpop.permute.xlu0 %812
        %814 = vrot.lane.b32.xlu0 %v799, 64
        %v815 = vpop.permute.xlu0 %814
        %vm816 = vcmask 261120
        %v819 = vsel %vm816, %v660, %v777
        %v822 = vsel %vm816, %v662, %v779
        %v825 = vsel %vm816, %v664, %v781
        %v828 = vsel %vm816, %v666, %v783
        %v831 = vsel %vm816, %v668, %v785
        %v834 = vsel %vm816, %v670, %v787
        %v837 = vsel %vm816, %v672, %v789
        %v840 = vsel %vm816, %v674, %v791
        %vm841 = vcmask 523264
        %v843 = vsel %vm841, %v819, %v801
        %v845 = vsel %vm841, %v822, %v803
        %v847 = vsel %vm841, %v825, %v805
        %v849 = vsel %vm841, %v828, %v807
        %v851 = vsel %vm841, %v831, %v809
        %v853 = vsel %vm841, %v834, %v811
        %v855 = vsel %vm841, %v837, %v813
        %v857 = vsel %vm841, %v840, %v815
        %v858 = vld [vmem:[%s3] sm:$0xf]
        %v859 = vld [vmem:[%s3 + $0x4] sm:$0xf]
        %v860 = vld [vmem:[%s3 + $0x8] sm:$0xf]
        %v861 = vld [vmem:[%s3 + $0xc] sm:$0xf]
        %v862 = vld [vmem:[%s3 + $0x10] sm:$0xf]
        %v863 = vld [vmem:[%s3 + $0x14] sm:$0xf]
        %v864 = vld [vmem:[%s3 + $0x18] sm:$0xf]
        %v865 = vld [vmem:[%s3 + $0x1c] sm:$0xf]
        %v866 = vld [vmem:[%s3 + $0x20] sm:$0xf]
        %v867 = vld [vmem:[%s3 + $0x24] sm:$0xf]
        %v868 = vld [vmem:[%s3 + $0x28] sm:$0xf]
        %v869 = vld [vmem:[%s3 + $0x2c] sm:$0xf]
        %v872 = vunpack.c.l.b16 %v676
        %v873 = vunpack.c.l.b16 %v677
        %v874 = vpack.c.b16 %v873, %v872
        %v876 = vshrl.u32 %v874, 16
        %v878 = vshll.u32 %v874, 16
        %v880 = vrot.slane %v878, 1
        %v881 = vor.u32 %v876, %v880
        %882 = vrot.lane.b32.xlu0 %v881, 32
        %v883 = vpop.permute.xlu0 %882
        %v884 = vrot.slane %v874, 1
        %885 = vrot.lane.b32.xlu0 %v884, 64
        %v886 = vpop.permute.xlu0 %885
        %v889 = vsel %vm816, %v676, %v883
        %v891 = vsel %vm841, %v889, %v886
        %s892 = scalar_lea.vmem %s3, 48
        %v893 = vld [vmem:[%s892] sm:$0xf]
        %v894 = vld [vmem:[%s892 + $0x4] sm:$0xf]
        %v895 = vld [vmem:[%s892 + $0x8] sm:$0xf]
        %v896 = vld [vmem:[%s892 + $0xc] sm:$0xf]
        %v897 = vld [vmem:[%s892 + $0x10] sm:$0xf]
        %v898 = vld [vmem:[%s892 + $0x14] sm:$0xf]
        %v899 = vld [vmem:[%s892 + $0x18] sm:$0xf]
        %v900 = vld [vmem:[%s892 + $0x1c] sm:$0xf]
        %v901 = vld [vmem:[%s892 + $0x20] sm:$0xf]
        %v902 = vld [vmem:[%s892 + $0x24] sm:$0xf]
        %v903 = vld [vmem:[%s892 + $0x28] sm:$0xf]
        %v904 = vld [vmem:[%s892 + $0x2c] sm:$0xf]
        %v913 = vunpack.c.l.b16 %v845
        %v914 = vunpack.c.l.b16 %v847
        %v915 = vunpack.c.l.b16 %v849
        %v916 = vunpack.c.l.b16 %v851
        %v917 = vunpack.c.l.b16 %v853
        %v918 = vunpack.c.l.b16 %v855
        %v919 = vunpack.c.l.b16 %v857
        %v920 = vunpack.c.l.b16 %v891
        %v921 = vpack.c.b16 %v914, %v913
        %v922 = vpack.c.b16 %v916, %v915
        %v923 = vpack.c.b16 %v918, %v917
        %v924 = vpack.c.b16 %v920, %v919
        %v937 = vunpack.c.l.b16 %v893
        %v938 = vunpack.c.l.b16 %v894
        %v939 = vunpack.c.l.b16 %v895
        %v940 = vunpack.c.l.b16 %v896
        %v941 = vunpack.c.l.b16 %v897
        %v942 = vunpack.c.l.b16 %v898
        %v943 = vunpack.c.l.b16 %v899
        %v944 = vunpack.c.l.b16 %v900
        %v945 = vunpack.c.l.b16 %v901
        %v946 = vunpack.c.l.b16 %v902
        %v947 = vunpack.c.l.b16 %v903
        %v948 = vunpack.c.l.b16 %v904
        %v949 = vpack.c.b16 %v938, %v937
        %v950 = vpack.c.b16 %v940, %v939
        %v951 = vpack.c.b16 %v942, %v941
        %v952 = vpack.c.b16 %v944, %v943
        %v953 = vpack.c.b16 %v946, %v945
        %v954 = vpack.c.b16 %v948, %v947
        %vm961 = vcmask 785408
        %v963 = vsel %vm961, %v921, 0
        %v966 = vsel %vm961, %v922, 0
        %v969 = vsel %vm961, %v923, 0
        %v972 = vsel %vm961, %v924, 0
        %974 = vmatpush.bf16.msra.mxu0 0
        %975 = vmatpush.bf16.msra.mxu0 0
        %976 = vmatpush.bf16.msra.mxu0 %v954
        %977 = vmatpush.bf16.msra.mxu0 %v953
        %978 = vmatpush.bf16.msra.mxu0 %v952
        %979 = vmatpush.bf16.msra.mxu0 %v951
        %980 = vmatpush.bf16.msra.mxu0 %v950
        %981 = vmatpush.bf16.msra.mxu0 %v949
        %982 = vmatmul.bf16.gmra.mxu0 %v963
        %v983 = vpop.f32.mrf.mxu0
        %v984 = vadd.f32 0.0, %v983
        %v985 = vpop.f32.mrf.mxu0
        %v986 = vadd.f32 0.0, %v985
        %987 = vmatmul.bf16.gmra.mxu0 %v966
        %v988 = vpop.f32.mrf.mxu0
        %v989 = vadd.f32 0.0, %v988
        %v990 = vpop.f32.mrf.mxu0
        %v991 = vadd.f32 0.0, %v990
        %992 = vmatmul.bf16.gmra.mxu0 %v969
        %v993 = vpop.f32.mrf.mxu0
        %v994 = vadd.f32 0.0, %v993
        %v995 = vpop.f32.mrf.mxu0
        %v996 = vadd.f32 0.0, %v995
        %997 = vmatmul.bf16.gmra.mxu0 %v972
        %v998 = vpop.f32.mrf.mxu0
        %v999 = vadd.f32 0.0, %v998
        %v1000 = vpop.f32.mrf.mxu0
        %v1001 = vadd.f32 0.0, %v1000
        %1002 = vdwg.mxu0
        %v1004 = vunpack.c.l.b16 %v843
        %v1005 = vpack.c.b16 %v913, %v1004
        %v1006 = vpack.c.b16 %v915, %v914
        %v1007 = vpack.c.b16 %v917, %v916
        %v1008 = vpack.c.b16 %v919, %v918
        %v1021 = vunpack.c.l.b16 %v858
        %v1022 = vunpack.c.l.b16 %v859
        %v1023 = vunpack.c.l.b16 %v860
        %v1024 = vunpack.c.l.b16 %v861
        %v1025 = vunpack.c.l.b16 %v862
        %v1026 = vunpack.c.l.b16 %v863
        %v1027 = vunpack.c.l.b16 %v864
        %v1028 = vunpack.c.l.b16 %v865
        %v1029 = vunpack.c.l.b16 %v866
        %v1030 = vunpack.c.l.b16 %v867
        %v1031 = vunpack.c.l.b16 %v868
        %v1032 = vunpack.c.l.b16 %v869
        %v1033 = vpack.c.b16 %v1022, %v1021
        %v1034 = vpack.c.b16 %v1024, %v1023
        %v1035 = vpack.c.b16 %v1026, %v1025
        %v1036 = vpack.c.b16 %v1028, %v1027
        %v1037 = vpack.c.b16 %v1030, %v1029
        %v1038 = vpack.c.b16 %v1032, %v1031
        %v1046 = vsel %vm961, %v1005, 0
        %v1049 = vsel %vm961, %v1006, 0
        %v1052 = vsel %vm961, %v1007, 0
        %v1055 = vsel %vm961, %v1008, 0
        %1057 = vmatpush.bf16.msra.mxu0 0
        %1058 = vmatpush.bf16.msra.mxu0 0
        %1059 = vmatpush.bf16.msra.mxu0 %v1038
        %1060 = vmatpush.bf16.msra.mxu0 %v1037
        %1061 = vmatpush.bf16.msra.mxu0 %v1036
        %1062 = vmatpush.bf16.msra.mxu0 %v1035
        %1063 = vmatpush.bf16.msra.mxu0 %v1034
        %1064 = vmatpush.bf16.msra.mxu0 %v1033
        %1065 = vmatmul.bf16.gmra.mxu0 %v1046
        %v1066 = vpop.f32.mrf.mxu0
        %v1067 = vadd.f32 %v984, %v1066
        %v1068 = vpop.f32.mrf.mxu0
        %v1069 = vadd.f32 %v986, %v1068
        %1070 = vmatmul.bf16.gmra.mxu0 %v1049
        %v1071 = vpop.f32.mrf.mxu0
        %v1072 = vadd.f32 %v989, %v1071
        %v1073 = vpop.f32.mrf.mxu0
        %v1074 = vadd.f32 %v991, %v1073
        %1075 = vmatmul.bf16.gmra.mxu0 %v1052
        %v1076 = vpop.f32.mrf.mxu0
        %v1077 = vadd.f32 %v994, %v1076
        %v1078 = vpop.f32.mrf.mxu0
        %v1079 = vadd.f32 %v996, %v1078
        %1080 = vmatmul.bf16.gmra.mxu0 %v1055
        %v1081 = vpop.f32.mrf.mxu0
        %v1082 = vadd.f32 %v999, %v1081
        %v1083 = vpop.f32.mrf.mxu0
        %v1084 = vadd.f32 %v1001, %v1083
        %1085 = vdwg.mxu0
        %v1088 = vunpack.c.l.b16 %v678
        %v1089 = vunpack.c.l.b16 %v679
        %v1090 = vpack.c.b16 %v1089, %v1088
        %v1092 = vshrl.u32 %v1090, 16
        %v1094 = vshll.u32 %v1090, 16
        %v1096 = vrot.slane %v1094, 1
        %v1097 = vor.u32 %v1092, %v1096
        %1098 = vrot.lane.b32.xlu0 %v1097, 32
        %v1099 = vpop.permute.xlu0 %1098
        %v1100 = vrot.slane %v1090, 1
        %1101 = vrot.lane.b32.xlu0 %v1100, 64
        %v1102 = vpop.permute.xlu0 %1101
        %v1105 = vsel %vm816, %v678, %v1099
        %v1107 = vsel %vm841, %v1105, %v1102
        %s1108 = scalar_lea.vmem %s3, 96
        %v1109 = vld [vmem:[%s1108] sm:$0xf]
        %v1110 = vld [vmem:[%s1108 + $0x4] sm:$0xf]
        %v1111 = vld [vmem:[%s1108 + $0x8] sm:$0xf]
        %v1112 = vld [vmem:[%s1108 + $0xc] sm:$0xf]
        %v1113 = vld [vmem:[%s1108 + $0x10] sm:$0xf]
        %v1114 = vld [vmem:[%s1108 + $0x14] sm:$0xf]
        %v1115 = vld [vmem:[%s1108 + $0x18] sm:$0xf]
        %v1116 = vld [vmem:[%s1108 + $0x1c] sm:$0xf]
        %v1117 = vld [vmem:[%s1108 + $0x20] sm:$0xf]
        %v1118 = vld [vmem:[%s1108 + $0x24] sm:$0xf]
        %v1119 = vld [vmem:[%s1108 + $0x28] sm:$0xf]
        %v1120 = vld [vmem:[%s1108 + $0x2c] sm:$0xf]
        %v1122 = vunpack.c.l.b16 %v1107
        %v1123 = vpack.c.b16 %v1122, %v920
        %v1136 = vunpack.c.l.b16 %v1109
        %v1137 = vunpack.c.l.b16 %v1110
        %v1138 = vunpack.c.l.b16 %v1111
        %v1139 = vunpack.c.l.b16 %v1112
        %v1140 = vunpack.c.l.b16 %v1113
        %v1141 = vunpack.c.l.b16 %v1114
        %v1142 = vunpack.c.l.b16 %v1115
        %v1143 = vunpack.c.l.b16 %v1116
        %v1144 = vunpack.c.l.b16 %v1117
        %v1145 = vunpack.c.l.b16 %v1118
        %v1146 = vunpack.c.l.b16 %v1119
        %v1147 = vunpack.c.l.b16 %v1120
        %v1148 = vpack.c.b16 %v1137, %v1136
        %v1149 = vpack.c.b16 %v1139, %v1138
        %v1150 = vpack.c.b16 %v1141, %v1140
        %v1151 = vpack.c.b16 %v1143, %v1142
        %v1152 = vpack.c.b16 %v1145, %v1144
        %v1153 = vpack.c.b16 %v1147, %v1146
        %v1161 = vsel %vm961, %v1123, 0
        %1163 = vmatpush.bf16.msra.mxu0 0
        %1164 = vmatpush.bf16.msra.mxu0 0
        %1165 = vmatpush.bf16.msra.mxu0 %v1153
        %1166 = vmatpush.bf16.msra.mxu0 %v1152
        %1167 = vmatpush.bf16.msra.mxu0 %v1151
        %1168 = vmatpush.bf16.msra.mxu0 %v1150
        %1169 = vmatpush.bf16.msra.mxu0 %v1149
        %1170 = vmatpush.bf16.msra.mxu0 %v1148
        %1171 = vmatmul.bf16.gmra.mxu0 %v1049
        %v1172 = vpop.f32.mrf.mxu0
        %v1173 = vadd.f32 0.0, %v1172
        %v1174 = vpop.f32.mrf.mxu0
        %v1175 = vadd.f32 0.0, %v1174
        %1176 = vmatmul.bf16.gmra.mxu0 %v1052
        %v1177 = vpop.f32.mrf.mxu0
        %v1178 = vadd.f32 0.0, %v1177
        %v1179 = vpop.f32.mrf.mxu0
        %v1180 = vadd.f32 0.0, %v1179
        %1181 = vmatmul.bf16.gmra.mxu0 %v1055
        %v1182 = vpop.f32.mrf.mxu0
        %v1183 = vadd.f32 0.0, %v1182
        %v1184 = vpop.f32.mrf.mxu0
        %v1185 = vadd.f32 0.0, %v1184
        %1186 = vmatmul.bf16.gmra.mxu0 %v1161
        %v1187 = vpop.f32.mrf.mxu0
        %v1188 = vadd.f32 0.0, %v1187
        %v1189 = vpop.f32.mrf.mxu0
        %v1190 = vadd.f32 0.0, %v1189
        %1191 = vdwg.mxu0
        %v1192 = vadd.f32 %v1067, %v1173
        %v1193 = vadd.f32 %v1069, %v1175
        %v1194 = vadd.f32 %v1072, %v1178
        %v1195 = vadd.f32 %v1074, %v1180
        %v1196 = vadd.f32 %v1077, %v1183
        %v1197 = vadd.f32 %v1079, %v1185
        %v1198 = vadd.f32 %v1082, %v1188
        %v1199 = vadd.f32 %v1084, %v1190
        %v1200 = vld [vmem:[%s4] sm:$0x1]
        %v1202 = vperm.slane %v1200, 0
        %v1204 = vadd.f32 %v1192, %v1202
        %v1205 = vadd.f32 %v1193, %v1202
        %v1206 = vadd.f32 %v1194, %v1202
        %v1207 = vadd.f32 %v1195, %v1202
        %v1208 = vadd.f32 %v1196, %v1202
        %v1209 = vadd.f32 %v1197, %v1202
        %v1210 = vadd.f32 %v1198, %v1202
        %v1211 = vadd.f32 %v1199, %v1202
        %v1212 = vmax.f32 %v1204, 0.0
        %v1213 = vmax.f32 %v1205, 0.0
        %v1214 = vmax.f32 %v1206, 0.0
        %v1215 = vmax.f32 %v1207, 0.0
        %v1216 = vmax.f32 %v1208, 0.0
        %v1217 = vmax.f32 %v1209, 0.0
        %v1218 = vmax.f32 %v1210, 0.0
        %v1219 = vmax.f32 %v1211, 0.0
        %v1220 = vpack.c.bf16 %v1213, %v1212
        %v1221 = vpack.c.bf16 %v1215, %v1214
        %v1222 = vpack.c.bf16 %v1217, %v1216
        %v1223 = vpack.c.bf16 %v1219, %v1218
        %v1224 = vld [vmem:[%s5] sm:$0xf]
        %v1225 = vld [vmem:[%s5 + $0x4] sm:$0xf]
        %v1226 = vld [vmem:[%s5 + $0x8] sm:$0xf]
        %v1227 = vld [vmem:[%s5 + $0xc] sm:$0xf]
        %v1228 = vld [vmem:[%s6] sm:$0x1]
        %v1230 = vperm.slane %v1228, 0
        %v1236 = vunpack.c.l.b16 %v1224
        %v1237 = vunpack.c.l.b16 %v1225
        %v1238 = vunpack.c.l.b16 %v1226
        %v1239 = vunpack.c.l.b16 %v1227
        %v1240 = vpack.c.b16 %v1237, %v1236
        %v1241 = vpack.c.b16 %v1239, %v1238
        %v1245 = vsel %vm816, %v1220, 0
        %v1248 = vsel %vm816, %v1221, 0
        %v1251 = vsel %vm816, %v1222, 0
        %v1254 = vsel %vm816, %v1223, 0
        %1256 = vmatpush.bf16.msra.mxu0 0
        %1257 = vmatpush.bf16.msra.mxu0 0
        %1258 = vmatpush.bf16.msra.mxu0 0
        %1259 = vmatpush.bf16.msra.mxu0 0
        %1260 = vmatpush.bf16.msra.mxu0 0
        %1261 = vmatpush.bf16.msra.mxu0 0
        %1262 = vmatpush.bf16.msra.mxu0 %v1241
        %1263 = vmatpush.bf16.msra.mxu0 %v1240
        %1264 = vmatmul.bf16.gmra.mxu0 %v1245
        %v1265 = vpop.f32.mrf.mxu0
        %v1266 = vadd.f32 %v1230, %v1265
        %v1267 = vpop.f32.mrf.mxu0
        %v1268 = vadd.f32 %v1230, %v1267
        %1269 = vmatmul.bf16.gmra.mxu0 %v1248
        %v1270 = vpop.f32.mrf.mxu0
        %v1271 = vadd.f32 %v1230, %v1270
        %v1272 = vpop.f32.mrf.mxu0
        %v1273 = vadd.f32 %v1230, %v1272
        %1274 = vmatmul.bf16.gmra.mxu0 %v1251
        %v1275 = vpop.f32.mrf.mxu0
        %v1276 = vadd.f32 %v1230, %v1275
        %v1277 = vpop.f32.mrf.mxu0
        %v1278 = vadd.f32 %v1230, %v1277
        %1279 = vmatmul.bf16.gmra.mxu0 %v1254
        %v1280 = vpop.f32.mrf.mxu0
        %v1281 = vadd.f32 %v1230, %v1280
        %v1282 = vpop.f32.mrf.mxu0
        %v1283 = vadd.f32 %v1230, %v1282
        %1284 = vdwg.mxu0
        %v1285 = vadd.f32 %v1266, %v1268
        %v1286 = vadd.f32 %v1285, %v1271
        %v1287 = vadd.f32 %v1286, %v1273
        %v1288 = vadd.f32 %v1287, %v1276
        %v1289 = vadd.f32 %v1288, %v1278
        %v1290 = vadd.f32 %v1289, %v1281
        %v1291 = vadd.f32 %v1290, %v1283
        %v1292 = vrot.slane %v1291, 4
        %v1293 = vadd.f32 %v1291, %v1292
        %v1294 = vrot.slane %v1293, 2
        %v1295 = vadd.f32 %v1293, %v1294
        %v1296 = vrot.slane %v1295, 1
        %v1297 = vadd.f32 %v1295, %v1296
        %v1298 = vmul.f32 %v1297, 0.015625
        %v1299 = vld [vmem:[%s7] sm:$0xff]
        %v1300 = vld [vmem:[%s7 + $0x8] sm:$0xff]
        %v1301 = vld [vmem:[%s7 + $0x10] sm:$0xff]
        %v1302 = vld [vmem:[%s7 + $0x18] sm:$0xff]
        %v1303 = vld [vmem:[%s7 + $0x20] sm:$0xff]
        %v1304 = vld [vmem:[%s7 + $0x28] sm:$0xff]
        %v1305 = vld [vmem:[%s7 + $0x30] sm:$0xff]
        %v1306 = vld [vmem:[%s7 + $0x38] sm:$0xff]
        %v1307 = vld [vmem:[%s7 + $0x40] sm:$0xff]
        %v1308 = vld [vmem:[%s7 + $0x48] sm:$0xff]
        %v1309 = vld [vmem:[%s7 + $0x50] sm:$0xff]
        %v1310 = vld [vmem:[%s7 + $0x58] sm:$0xff]
        %v1311 = vld [vmem:[%s7 + $0x60] sm:$0xff]
        %v1312 = vld [vmem:[%s7 + $0x68] sm:$0xff]
        %v1313 = vld [vmem:[%s7 + $0x70] sm:$0xff]
        %v1314 = vld [vmem:[%s7 + $0x78] sm:$0xff]
        %1315 = vmatpush.msra.mxu0 %v1314
        %1316 = vmatpush.msra.mxu0 %v1313
        %1317 = vmatpush.msra.mxu0 %v1312
        %1318 = vmatpush.msra.mxu0 %v1311
        %1319 = vmatpush.msra.mxu0 %v1310
        %1320 = vmatpush.msra.mxu0 %v1309
        %1321 = vmatpush.msra.mxu0 %v1308
        %1322 = vmatpush.msra.mxu0 %v1307
        %1323 = vmatpush.msra.mxu0 %v1306
        %1324 = vmatpush.msra.mxu0 %v1305
        %1325 = vmatpush.msra.mxu0 %v1304
        %1326 = vmatpush.msra.mxu0 %v1303
        %1327 = vmatpush.msra.mxu0 %v1302
        %1328 = vmatpush.msra.mxu0 %v1301
        %1329 = vmatpush.msra.mxu0 %v1300
        %1330 = vmatpush.msra.mxu0 %v1299
        %1331 = vmatmul.f32.gmra.mxu0 %v1298
        %v1332 = vpop.f32.mrf.mxu0
        %v1333 = vadd.f32 0.0, %v1332
        %1334 = vdwg.mxu0
        %v1335 = vmax.f32 %v1333, 0.0
        %v1336 = vld [vmem:[%s8] sm:$0xff]
        %vm1337 = vcmask 64512
        %v1339 = vsel %vm1337, %v1335, 0
        %1341 = vmatpush.msra.mxu0 0.0
        %1342 = vmatpush.msra.mxu0 0.0
        %1343 = vmatpush.msra.mxu0 0.0
        %1344 = vmatpush.msra.mxu0 0.0
        %1345 = vmatpush.msra.mxu0 0.0
        %1346 = vmatpush.msra.mxu0 0.0
        %1347 = vmatpush.msra.mxu0 0.0
        %1348 = vmatpush.msra.mxu0 0.0
        %1349 = vmatpush.msra.mxu0 0.0
        %1350 = vmatpush.msra.mxu0 0.0
        %1351 = vmatpush.msra.mxu0 0.0
        %1352 = vmatpush.msra.mxu0 0.0
        %1353 = vmatpush.msra.mxu0 0.0
        %1354 = vmatpush.msra.mxu0 0.0
        %1355 = vmatpush.msra.mxu0 0.0
        %1356 = vmatpush.msra.mxu0 %v1336
        %1357 = vmatmul.f32.gmra.mxu0 %v1339
        %v1358 = vpop.f32.mrf.mxu0
        %v1359 = vadd.f32 0.0, %v1358
        %1360 = vdwg.mxu0
        %v1361 = vxor.u32 %v1359, 2147483648
        %v1362 = vmul.f32 %v1361, 1.442695
        %v1363 = vpow.pop %v1362
        %v1364 = vadd.f32 %v1363, 1.0
        %v1365 = vrcp.pop %v1364
        %v1366 = vmul.f32 %v1364, %v1365
        %v1367 = vsub.f32 1.0, %v1366
        %v1368 = vmul.f32 %v1365, %v1367
        %v1369 = vadd.f32 %v1365, %v1368
        %vm1370 = vweird.f32 %v1364
        %vm1371 = vweird.f32 %v1365
        %vm1372 = vmor %vm1370, %vm1371
        %v1373 = vsel %vm1372, %v1365, %v1369
        %v1374 = vand.u32 2147483647, %v1364
        %vm1375 = vcmp.eq.f32.partialorder %v1374, 8.507059e+37
        %v1376 = vand.u32 %v1364, 2147483648
        %v1377 = vor.u32 1.1754944e-38, %v1376
        %v1378 = vsel %vm1375, %v1377, %v1373
        %v1379 = vmul.f32 1.0, %v1378
        %v1380 = vperm.slane %v1379, 0
        %v1381 = vmul.f32 %v1266, %v1380
        %v1382 = vmul.f32 %v1268, %v1380
        %v1383 = vmul.f32 %v1271, %v1380
        %v1384 = vmul.f32 %v1273, %v1380
        %v1385 = vmul.f32 %v1276, %v1380
        %v1386 = vmul.f32 %v1278, %v1380
        %v1387 = vmul.f32 %v1281, %v1380
        %v1388 = vmul.f32 %v1283, %v1380
        %v1389 = vadd.f32 %v1381, %v332
        %v1390 = vadd.f32 %v1382, %v333
        %v1391 = vadd.f32 %v1383, %v334
        %v1392 = vadd.f32 %v1384, %v335
        %v1393 = vadd.f32 %v1385, %v336
        %v1394 = vadd.f32 %v1386, %v337
        %v1395 = vadd.f32 %v1387, %v338
        %v1396 = vadd.f32 %v1388, %v339
        %v1397 = vmax.f32 %v1389, 0.0
        %v1398 = vmax.f32 %v1390, 0.0
        %v1399 = vmax.f32 %v1391, 0.0
        %v1400 = vmax.f32 %v1392, 0.0
        %v1401 = vmax.f32 %v1393, 0.0
        %v1402 = vmax.f32 %v1394, 0.0
        %v1403 = vmax.f32 %v1395, 0.0
        %v1404 = vmax.f32 %v1396, 0.0
        %1405 = vst [vmem:[%s325] sm:$0xff] %v1397
        %1406 = vst [vmem:[%s325 + $0x8] sm:$0xff] %v1398
        %1407 = vst [vmem:[%s325 + $0x10] sm:$0xff] %v1399
        %1408 = vst [vmem:[%s325 + $0x18] sm:$0xff] %v1400
        %1409 = vst [vmem:[%s325 + $0x20] sm:$0xff] %v1401
        %1410 = vst [vmem:[%s325 + $0x28] sm:$0xff] %v1402
        %1411 = vst [vmem:[%s325 + $0x30] sm:$0xff] %v1403
        %1412 = vst [vmem:[%s325 + $0x38] sm:$0xff] %v1404
        %s1413 = sand.u32 %s225, 1
        %s1414 = scalar_lea.sflag [#allocation4], %s1413
        %s1415 = sand.u32 %s225, 1
        %s1416 = smul.addr %s1415, 64
        %s1417 = scalar_lea.vmem [#allocation3], %s1416
        // Predicated region
        $region57: #{tpu_custom_call.1} parent=55 // pred_check
          %p1418 = pneg %p235
        $region58: #{tpu_custom_call.1} parent=55 // pred_check_branch
          %1420 = sbr.rel (%p1418) target = $region60
        $region59: #{tpu_custom_call.1} parent=55 // pred_region
          %1422 = vsyncadd %s1414, 0
          %s1423 = smul.addr %s23, 8
          %s1424 = smul.addr %s1423, 8
          %s1425 = scalar_lea.hbm %s9, %s1424
          %s1426 = sshll.u32 %s1417, 4
          %s1427 = int_to_ptr.vmem [resolvable:$true] %s1426
          %s1428 = sshll.u32 %s1425, 4
          %s1429 = int_to_ptr.hbm [resolvable:$true] %s1428
          %1434 = dma.vmem_to_hbm [thread:$0]  %s1427, 1024, %s1429, %s1414, 128, 128, 8
        $region60: #{tpu_custom_call.1} parent=55 // pred_fallthru
          _
      $region56: #{tpu_custom_call.1} parent=5 // pred_fallthru
        _
      %p1435 = scmp.le.s32.totalorder 2, %s18
      // Predicated region
      $region61: #{tpu_custom_call.1} parent=5 // pred_check
        %p1436 = pneg %p1435
      $region62: #{tpu_custom_call.1} parent=5 // pred_check_branch
        %1438 = sbr.rel (%p1436) target = $region64
      $region63: #{tpu_custom_call.1} parent=5 // pred_region
        %s1439 = ssub.s32 %s18, 2
        // Predicated region
        $region65: #{tpu_custom_call.1} parent=63 // pred_check
          %p1440 = pneg %p241
        $region66: #{tpu_custom_call.1} parent=63 // pred_check_branch
          %1442 = sbr.rel (%p1440) target = $region68
        $region67: #{tpu_custom_call.1} parent=63 // pred_region
          %s1443 = sand.u32 %s226, 1
          %s1444 = scalar_lea.sflag [#allocation4], %s1443
          %s1445 = sand.u32 %s226, 1
          %s1446 = smul.addr %s1445, 64
          %s1447 = scalar_lea.vmem [#allocation3], %s1446
          %1449 = dma.done %s1444, 1024
        $region68: #{tpu_custom_call.1} parent=63 // pred_fallthru
          _
      $region64: #{tpu_custom_call.1} parent=5 // pred_fallthru
        _
    $region6: #{tpu_custom_call.1} parent=1 // loop_footer
      %s22 = sadd.s32 1, %s18
    $region7: #{tpu_custom_call.1} parent=1 // loop_footer_branch
      %17 = sbr.rel target = $region3
    $region8: #{tpu_custom_call.1} parent=1 // loop_exit
      _
    %1450 = vsyncpa [#allocation4], 1
    %s1451 = scalar_lea.sflag [#allocation4], 1
    %1452 = vsyncpa %s1451, 1

</llo_original>
